<compile_context>
chip_gen: v5e
topology: v5e:2x2
jax: 0.10.0
libtpu: 0.0.40
codegen_flags: <defaults>
</compile_context>

<pallas_src>
import jax
import jax.numpy as jnp
from jax.experimental import pallas as pl
from jax.experimental.pallas import tpu as pltpu


def make_gather_einsum_kernel(experts_per_step: int, rows_per_expert: int):
    Eb, BK = experts_per_step, rows_per_expert

    def kernel(gind_ref, x_ref, w_ref, y_ref, xg_ref):
        # gind_ref: SMEM (E*B*K,) int32   -- scalar-prefetched global row ids
        # x_ref:    VMEM (B*T, I)         -- flattened X, resident (const map)
        # w_ref:    VMEM (Eb, I, J)       -- Eb expert weight slabs
        # y_ref:    VMEM (Eb, B*K, J)     -- lane-dense output slab
        # xg_ref:   VMEM (B*K, I) scratch -- gathered rows for one expert
        step = pl.program_id(0)
        base = step * (Eb * BK)
        # Static Python loops: Eb and BK are small compile-time constants at
        # these shapes.  Destination rows are static; only the source row
        # index (from SMEM) is dynamic.
        # TODO(synk): switch to lax.fori_loop(..., unroll=True) for large B*K.
        for le in range(Eb):
            for r in range(BK):
                idx = gind_ref[base + le * BK + r]      # dynamic SMEM scalar
                xg_ref[pl.ds(r, 1), :] = x_ref[pl.ds(idx, 1), :]
            y_ref[le] = jnp.dot(
                xg_ref[...], w_ref[le],
                preferred_element_type=jnp.float32).astype(y_ref.dtype)

    return kernel


def _experts_per_step(E, I, J, BK, itemsize=4, budget_bytes=4 << 20):
    """Pick how many experts to process per grid step.

    Amortizes the ~0.35us per-step pipeline overhead when per-expert work is
    tiny, while keeping the (double-buffered) W + output blocks inside a small
    VMEM budget.  Always a divisor of E so the grid is exact.
    """
    per_expert = (I * J + BK * J) * itemsize
    eb = int(max(1, min(E, budget_bytes // max(per_expert, 1))))
    while E % eb:
        eb -= 1
    return eb


def reshaped_embedding_gather_einsum(X, ind, W):
    B, T, I = X.shape
    _, E, K = ind.shape
    assert W.shape[0] == E and W.shape[1] == I
    J = W.shape[2]
    BK = B * K

    # Flatten X so one resident (B*T, I) tile serves every grid step.
    X_flat = X.reshape(B * T, I)

    # Global row indices into X_flat, clamped (no runtime OOB check in-kernel;
    # PyTorch would raise instead), flattened expert-major:
    #   gind[e*B*K + b*K + k] = clip(ind[b, e, k], 0, T-1) + b*T
    offset = jnp.arange(B, dtype=jnp.int32)[:, None, None] * T
    gind = jnp.clip(ind.astype(jnp.int32), 0, T - 1) + offset          # (B,E,K)
    gind = jnp.transpose(gind, (1, 0, 2)).reshape(E * BK)              # (E*BK,)

    Eb = _experts_per_step(E, I, J, BK, itemsize=X.dtype.itemsize)
    grid = (E // Eb,)

    grid_spec = pltpu.PrefetchScalarGridSpec(
        num_scalar_prefetch=1,           # gind -> SMEM, visible to index_maps
        grid=grid,
        in_specs=[
            # Full flattened X; constant block index -> stays VMEM-resident.
            pl.BlockSpec((B * T, I), lambda s, g: (0, 0)),
            # Eb expert weight slabs per step; each W[e] DMA'd exactly once.
            pl.BlockSpec((Eb, I, J), lambda s, g: (s, 0, 0)),
        ],
        # Lane-dense (Eb, B*K, J) output slab per step.
        out_specs=pl.BlockSpec((Eb, BK, J), lambda s, g: (s, 0, 0)),
        scratch_shapes=[pltpu.VMEM((BK, I), X.dtype)],
    )

    y = pl.pallas_call(
        make_gather_einsum_kernel(Eb, BK),
        out_shape=jax.ShapeDtypeStruct((E, BK, J), X.dtype),
        grid_spec=grid_spec,
        compiler_params=pltpu.CompilerParams(
            # Steps are independent -> shard across TensorCores when grid > 1.
            dimension_semantics=("parallel",),
            # 48 MiB: within scoped limits on v5e/v6e and leaves headroom on
            # v7x's 64 MiB/TC; re-derive per generation before growing shapes.
            vmem_limit_bytes=48 * 1024 * 1024,
        ),
    )(gind, X_flat, W)

    # (E, B*K, J) -> (B, E, K, J) to match the reference layout.
    return jnp.transpose(y.reshape(E, B, K, J), (1, 0, 2, 3))


if __name__ == "__main__":
    # Small shapes consistent with the module's forward.
    B, T, I, E, K, J = 2, 16, 32, 4, 8, 16

    key = jax.random.PRNGKey(0)
    kx, ki, kw = jax.random.split(key, 3)

    X = jax.random.normal(kx, (B, T, I), dtype=jnp.float32)
    ind = jax.random.randint(ki, (B, E, K), 0, T, dtype=jnp.int32)
    # Deterministic parameter init mirroring torch.rand(E, I, J)
    W = jax.random.uniform(kw, (E, I, J), dtype=jnp.float32)

    Y = reshaped_embedding_gather_einsum(X, ind, W)
    jax.block_until_ready(Y)

    # Pure-JAX reference matching the PyTorch semantics exactly.
    offset = jnp.arange(B, dtype=jnp.int32)[:, None, None] * T
    X_flat = X.reshape(B * T, I)
    X_gathered = jnp.take(X_flat, ind + offset, axis=0)        # (B, E, K, I)
    Y_ref = jnp.einsum("beki,eij->bekj", X_gathered, W)        # (B, E, K, J)

    assert Y.shape == (B, E, K, J)
    assert jnp.allclose(Y, Y_ref, atol=1e-4, rtol=1e-4), "mismatch vs reference"
    print("KERNEL_OK")
</pallas_src>

<mosaic_0001>
module attributes {stable_mosaic.version = 11 : i64} {
  func.func @kernel(%arg0: i32, %arg1: memref<64xi32, #tpu.memory_space<smem>>, %arg2: memref<32x32xf32, #tpu.memory_space<vmem>>, %arg3: memref<4x32x16xf32, #tpu.memory_space<vmem>>, %arg4: memref<4x16x16xf32, #tpu.memory_space<vmem>>, %arg5: memref<16x32xf32, #tpu.memory_space<vmem>>) attributes {dimension_semantics = [#tpu.dimension_semantics<parallel>], iteration_bounds = array<i64: 1>, scalar_prefetch = 1 : i64, scratch_operands = 1 : i64, tpu.core_type = #tpu.core_type<tc>, window_params = [{pipeline_mode = #tpu.pipeline_mode<synchronous>, transform_indices = @transform_0, window_bounds = array<i64: 32, 32>}, {transform_indices = @transform_1, window_bounds = array<i64: 4, 32, 16>}, {transform_indices = @transform_2, window_bounds = array<i64: 4, 16, 16>}]} {
    %c64_i32 = arith.constant 64 : i32
    %0 = arith.muli %arg0, %c64_i32 : i32
    %c0_i32 = arith.constant 0 : i32
    %1 = arith.addi %0, %c0_i32 : i32
    %c0_i32_0 = arith.constant 0 : i32
    %2 = arith.addi %1, %c0_i32_0 : i32
    %3 = arith.index_cast %2 : i32 to index
    %4 = memref.load %arg1[%3] : memref<64xi32, #tpu.memory_space<smem>>
    %5 = arith.index_cast %4 : i32 to index
    %c0 = arith.constant 0 : index
    %6 = vector.load %arg2[%5, %c0] : memref<32x32xf32, #tpu.memory_space<vmem>>, vector<1x32xf32>
    %c0_1 = arith.constant 0 : index
    %c0_2 = arith.constant 0 : index
    %7 = vector.load %arg5[%c0_1, %c0_2] : memref<16x32xf32, #tpu.memory_space<vmem>>, vector<1x32xf32>
    tpu.vector_store %arg5[%c0_1, %c0_2], %6 {strides = array<i32>} : memref<16x32xf32, #tpu.memory_space<vmem>>, vector<1x32xf32>,
    %c0_i32_3 = arith.constant 0 : i32
    %8 = arith.addi %0, %c0_i32_3 : i32
    %c1_i32 = arith.constant 1 : i32
    %9 = arith.addi %8, %c1_i32 : i32
    %10 = arith.index_cast %9 : i32 to index
    %11 = memref.load %arg1[%10] : memref<64xi32, #tpu.memory_space<smem>>
    %12 = arith.index_cast %11 : i32 to index
    %c0_4 = arith.constant 0 : index
    %13 = vector.load %arg2[%12, %c0_4] : memref<32x32xf32, #tpu.memory_space<vmem>>, vector<1x32xf32>
    %c1 = arith.constant 1 : index
    %c0_5 = arith.constant 0 : index
    %14 = vector.load %arg5[%c1, %c0_5] : memref<16x32xf32, #tpu.memory_space<vmem>>, vector<1x32xf32>
    tpu.vector_store %arg5[%c1, %c0_5], %13 {strides = array<i32>} : memref<16x32xf32, #tpu.memory_space<vmem>>, vector<1x32xf32>,
    %c0_i32_6 = arith.constant 0 : i32
    %15 = arith.addi %0, %c0_i32_6 : i32
    %c2_i32 = arith.constant 2 : i32
    %16 = arith.addi %15, %c2_i32 : i32
    %17 = arith.index_cast %16 : i32 to index
    %18 = memref.load %arg1[%17] : memref<64xi32, #tpu.memory_space<smem>>
    %19 = arith.index_cast %18 : i32 to index
    %c0_7 = arith.constant 0 : index
    %20 = vector.load %arg2[%19, %c0_7] : memref<32x32xf32, #tpu.memory_space<vmem>>, vector<1x32xf32>
    %c2 = arith.constant 2 : index
    %c0_8 = arith.constant 0 : index
    %21 = vector.load %arg5[%c2, %c0_8] : memref<16x32xf32, #tpu.memory_space<vmem>>, vector<1x32xf32>
    tpu.vector_store %arg5[%c2, %c0_8], %20 {strides = array<i32>} : memref<16x32xf32, #tpu.memory_space<vmem>>, vector<1x32xf32>,
    %c0_i32_9 = arith.constant 0 : i32
    %22 = arith.addi %0, %c0_i32_9 : i32
    %c3_i32 = arith.constant 3 : i32
    %23 = arith.addi %22, %c3_i32 : i32
    %24 = arith.index_cast %23 : i32 to index
    %25 = memref.load %arg1[%24] : memref<64xi32, #tpu.memory_space<smem>>
    %26 = arith.index_cast %25 : i32 to index
    %c0_10 = arith.constant 0 : index
    %27 = vector.load %arg2[%26, %c0_10] : memref<32x32xf32, #tpu.memory_space<vmem>>, vector<1x32xf32>
    %c3 = arith.constant 3 : index
    %c0_11 = arith.constant 0 : index
    %28 = vector.load %arg5[%c3, %c0_11] : memref<16x32xf32, #tpu.memory_space<vmem>>, vector<1x32xf32>
    tpu.vector_store %arg5[%c3, %c0_11], %27 {strides = array<i32>} : memref<16x32xf32, #tpu.memory_space<vmem>>, vector<1x32xf32>,
    %c0_i32_12 = arith.constant 0 : i32
    %29 = arith.addi %0, %c0_i32_12 : i32
    %c4_i32 = arith.constant 4 : i32
    %30 = arith.addi %29, %c4_i32 : i32
    %31 = arith.index_cast %30 : i32 to index
    %32 = memref.load %arg1[%31] : memref<64xi32, #tpu.memory_space<smem>>
    %33 = arith.index_cast %32 : i32 to index
    %c0_13 = arith.constant 0 : index
    %34 = vector.load %arg2[%33, %c0_13] : memref<32x32xf32, #tpu.memory_space<vmem>>, vector<1x32xf32>
    %c4 = arith.constant 4 : index
    %c0_14 = arith.constant 0 : index
    %35 = vector.load %arg5[%c4, %c0_14] : memref<16x32xf32, #tpu.memory_space<vmem>>, vector<1x32xf32>
    tpu.vector_store %arg5[%c4, %c0_14], %34 {strides = array<i32>} : memref<16x32xf32, #tpu.memory_space<vmem>>, vector<1x32xf32>,
    %c0_i32_15 = arith.constant 0 : i32
    %36 = arith.addi %0, %c0_i32_15 : i32
    %c5_i32 = arith.constant 5 : i32
    %37 = arith.addi %36, %c5_i32 : i32
    %38 = arith.index_cast %37 : i32 to index
    %39 = memref.load %arg1[%38] : memref<64xi32, #tpu.memory_space<smem>>
    %40 = arith.index_cast %39 : i32 to index
    %c0_16 = arith.constant 0 : index
    %41 = vector.load %arg2[%40, %c0_16] : memref<32x32xf32, #tpu.memory_space<vmem>>, vector<1x32xf32>
    %c5 = arith.constant 5 : index
    %c0_17 = arith.constant 0 : index
    %42 = vector.load %arg5[%c5, %c0_17] : memref<16x32xf32, #tpu.memory_space<vmem>>, vector<1x32xf32>
    tpu.vector_store %arg5[%c5, %c0_17], %41 {strides = array<i32>} : memref<16x32xf32, #tpu.memory_space<vmem>>, vector<1x32xf32>,
    %c0_i32_18 = arith.constant 0 : i32
    %43 = arith.addi %0, %c0_i32_18 : i32
    %c6_i32 = arith.constant 6 : i32
    %44 = arith.addi %43, %c6_i32 : i32
    %45 = arith.index_cast %44 : i32 to index
    %46 = memref.load %arg1[%45] : memref<64xi32, #tpu.memory_space<smem>>
    %47 = arith.index_cast %46 : i32 to index
    %c0_19 = arith.constant 0 : index
    %48 = vector.load %arg2[%47, %c0_19] : memref<32x32xf32, #tpu.memory_space<vmem>>, vector<1x32xf32>
    %c6 = arith.constant 6 : index
    %c0_20 = arith.constant 0 : index
    %49 = vector.load %arg5[%c6, %c0_20] : memref<16x32xf32, #tpu.memory_space<vmem>>, vector<1x32xf32>
    tpu.vector_store %arg5[%c6, %c0_20], %48 {strides = array<i32>} : memref<16x32xf32, #tpu.memory_space<vmem>>, vector<1x32xf32>,
    %c0_i32_21 = arith.constant 0 : i32
    %50 = arith.addi %0, %c0_i32_21 : i32
    %c7_i32 = arith.constant 7 : i32
    %51 = arith.addi %50, %c7_i32 : i32
    %52 = arith.index_cast %51 : i32 to index
    %53 = memref.load %arg1[%52] : memref<64xi32, #tpu.memory_space<smem>>
    %54 = arith.index_cast %53 : i32 to index
    %c0_22 = arith.constant 0 : index
    %55 = vector.load %arg2[%54, %c0_22] : memref<32x32xf32, #tpu.memory_space<vmem>>, vector<1x32xf32>
    %c7 = arith.constant 7 : index
    %c0_23 = arith.constant 0 : index
    %56 = vector.load %arg5[%c7, %c0_23] : memref<16x32xf32, #tpu.memory_space<vmem>>, vector<1x32xf32>
    tpu.vector_store %arg5[%c7, %c0_23], %55 {strides = array<i32>} : memref<16x32xf32, #tpu.memory_space<vmem>>, vector<1x32xf32>,
    %c0_i32_24 = arith.constant 0 : i32
    %57 = arith.addi %0, %c0_i32_24 : i32
    %c8_i32 = arith.constant 8 : i32
    %58 = arith.addi %57, %c8_i32 : i32
    %59 = arith.index_cast %58 : i32 to index
    %60 = memref.load %arg1[%59] : memref<64xi32, #tpu.memory_space<smem>>
    %61 = arith.index_cast %60 : i32 to index
    %c0_25 = arith.constant 0 : index
    %62 = vector.load %arg2[%61, %c0_25] : memref<32x32xf32, #tpu.memory_space<vmem>>, vector<1x32xf32>
    %c8 = arith.constant 8 : index
    %c0_26 = arith.constant 0 : index
    %63 = vector.load %arg5[%c8, %c0_26] : memref<16x32xf32, #tpu.memory_space<vmem>>, vector<1x32xf32>
    tpu.vector_store %arg5[%c8, %c0_26], %62 {strides = array<i32>} : memref<16x32xf32, #tpu.memory_space<vmem>>, vector<1x32xf32>,
    %c0_i32_27 = arith.constant 0 : i32
    %64 = arith.addi %0, %c0_i32_27 : i32
    %c9_i32 = arith.constant 9 : i32
    %65 = arith.addi %64, %c9_i32 : i32
    %66 = arith.index_cast %65 : i32 to index
    %67 = memref.load %arg1[%66] : memref<64xi32, #tpu.memory_space<smem>>
    %68 = arith.index_cast %67 : i32 to index
    %c0_28 = arith.constant 0 : index
    %69 = vector.load %arg2[%68, %c0_28] : memref<32x32xf32, #tpu.memory_space<vmem>>, vector<1x32xf32>
    %c9 = arith.constant 9 : index
    %c0_29 = arith.constant 0 : index
    %70 = vector.load %arg5[%c9, %c0_29] : memref<16x32xf32, #tpu.memory_space<vmem>>, vector<1x32xf32>
    tpu.vector_store %arg5[%c9, %c0_29], %69 {strides = array<i32>} : memref<16x32xf32, #tpu.memory_space<vmem>>, vector<1x32xf32>,
    %c0_i32_30 = arith.constant 0 : i32
    %71 = arith.addi %0, %c0_i32_30 : i32
    %c10_i32 = arith.constant 10 : i32
    %72 = arith.addi %71, %c10_i32 : i32
    %73 = arith.index_cast %72 : i32 to index
    %74 = memref.load %arg1[%73] : memref<64xi32, #tpu.memory_space<smem>>
    %75 = arith.index_cast %74 : i32 to index
    %c0_31 = arith.constant 0 : index
    %76 = vector.load %arg2[%75, %c0_31] : memref<32x32xf32, #tpu.memory_space<vmem>>, vector<1x32xf32>
    %c10 = arith.constant 10 : index
    %c0_32 = arith.constant 0 : index
    %77 = vector.load %arg5[%c10, %c0_32] : memref<16x32xf32, #tpu.memory_space<vmem>>, vector<1x32xf32>
    tpu.vector_store %arg5[%c10, %c0_32], %76 {strides = array<i32>} : memref<16x32xf32, #tpu.memory_space<vmem>>, vector<1x32xf32>,
    %c0_i32_33 = arith.constant 0 : i32
    %78 = arith.addi %0, %c0_i32_33 : i32
    %c11_i32 = arith.constant 11 : i32
    %79 = arith.addi %78, %c11_i32 : i32
    %80 = arith.index_cast %79 : i32 to index
    %81 = memref.load %arg1[%80] : memref<64xi32, #tpu.memory_space<smem>>
    %82 = arith.index_cast %81 : i32 to index
    %c0_34 = arith.constant 0 : index
    %83 = vector.load %arg2[%82, %c0_34] : memref<32x32xf32, #tpu.memory_space<vmem>>, vector<1x32xf32>
    %c11 = arith.constant 11 : index
    %c0_35 = arith.constant 0 : index
    %84 = vector.load %arg5[%c11, %c0_35] : memref<16x32xf32, #tpu.memory_space<vmem>>, vector<1x32xf32>
    tpu.vector_store %arg5[%c11, %c0_35], %83 {strides = array<i32>} : memref<16x32xf32, #tpu.memory_space<vmem>>, vector<1x32xf32>,
    %c0_i32_36 = arith.constant 0 : i32
    %85 = arith.addi %0, %c0_i32_36 : i32
    %c12_i32 = arith.constant 12 : i32
    %86 = arith.addi %85, %c12_i32 : i32
    %87 = arith.index_cast %86 : i32 to index
    %88 = memref.load %arg1[%87] : memref<64xi32, #tpu.memory_space<smem>>
    %89 = arith.index_cast %88 : i32 to index
    %c0_37 = arith.constant 0 : index
    %90 = vector.load %arg2[%89, %c0_37] : memref<32x32xf32, #tpu.memory_space<vmem>>, vector<1x32xf32>
    %c12 = arith.constant 12 : index
    %c0_38 = arith.constant 0 : index
    %91 = vector.load %arg5[%c12, %c0_38] : memref<16x32xf32, #tpu.memory_space<vmem>>, vector<1x32xf32>
    tpu.vector_store %arg5[%c12, %c0_38], %90 {strides = array<i32>} : memref<16x32xf32, #tpu.memory_space<vmem>>, vector<1x32xf32>,
    %c0_i32_39 = arith.constant 0 : i32
    %92 = arith.addi %0, %c0_i32_39 : i32
    %c13_i32 = arith.constant 13 : i32
    %93 = arith.addi %92, %c13_i32 : i32
    %94 = arith.index_cast %93 : i32 to index
    %95 = memref.load %arg1[%94] : memref<64xi32, #tpu.memory_space<smem>>
    %96 = arith.index_cast %95 : i32 to index
    %c0_40 = arith.constant 0 : index
    %97 = vector.load %arg2[%96, %c0_40] : memref<32x32xf32, #tpu.memory_space<vmem>>, vector<1x32xf32>
    %c13 = arith.constant 13 : index
    %c0_41 = arith.constant 0 : index
    %98 = vector.load %arg5[%c13, %c0_41] : memref<16x32xf32, #tpu.memory_space<vmem>>, vector<1x32xf32>
    tpu.vector_store %arg5[%c13, %c0_41], %97 {strides = array<i32>} : memref<16x32xf32, #tpu.memory_space<vmem>>, vector<1x32xf32>,
    %c0_i32_42 = arith.constant 0 : i32
    %99 = arith.addi %0, %c0_i32_42 : i32
    %c14_i32 = arith.constant 14 : i32
    %100 = arith.addi %99, %c14_i32 : i32
    %101 = arith.index_cast %100 : i32 to index
    %102 = memref.load %arg1[%101] : memref<64xi32, #tpu.memory_space<smem>>
    %103 = arith.index_cast %102 : i32 to index
    %c0_43 = arith.constant 0 : index
    %104 = vector.load %arg2[%103, %c0_43] : memref<32x32xf32, #tpu.memory_space<vmem>>, vector<1x32xf32>
    %c14 = arith.constant 14 : index
    %c0_44 = arith.constant 0 : index
    %105 = vector.load %arg5[%c14, %c0_44] : memref<16x32xf32, #tpu.memory_space<vmem>>, vector<1x32xf32>
    tpu.vector_store %arg5[%c14, %c0_44], %104 {strides = array<i32>} : memref<16x32xf32, #tpu.memory_space<vmem>>, vector<1x32xf32>,
    %c0_i32_45 = arith.constant 0 : i32
    %106 = arith.addi %0, %c0_i32_45 : i32
    %c15_i32 = arith.constant 15 : i32
    %107 = arith.addi %106, %c15_i32 : i32
    %108 = arith.index_cast %107 : i32 to index
    %109 = memref.load %arg1[%108] : memref<64xi32, #tpu.memory_space<smem>>
    %110 = arith.index_cast %109 : i32 to index
    %c0_46 = arith.constant 0 : index
    %111 = vector.load %arg2[%110, %c0_46] : memref<32x32xf32, #tpu.memory_space<vmem>>, vector<1x32xf32>
    %c15 = arith.constant 15 : index
    %c0_47 = arith.constant 0 : index
    %112 = vector.load %arg5[%c15, %c0_47] : memref<16x32xf32, #tpu.memory_space<vmem>>, vector<1x32xf32>
    tpu.vector_store %arg5[%c15, %c0_47], %111 {strides = array<i32>} : memref<16x32xf32, #tpu.memory_space<vmem>>, vector<1x32xf32>,
    %c0_48 = arith.constant 0 : index
    %c0_49 = arith.constant 0 : index
    %113 = vector.load %arg5[%c0_48, %c0_49] : memref<16x32xf32, #tpu.memory_space<vmem>>, vector<16x32xf32>
    %c0_50 = arith.constant 0 : index
    %c0_51 = arith.constant 0 : index
    %c0_52 = arith.constant 0 : index
    %114 = vector.load %arg3[%c0_50, %c0_51, %c0_52] : memref<4x32x16xf32, #tpu.memory_space<vmem>>, vector<1x32x16xf32>
    %115 = vector.shape_cast %114 : vector<1x32x16xf32> to vector<32x16xf32>
    %cst = arith.constant dense<0.000000e+00> : vector<16x16xf32>
    %116 = tpu.matmul %113, %115, %cst {dimension_numbers = #tpu.dot_dimension_numbers<[1], [0], [0], [1], [0, 0, 1, 1], [], []>} : vector<16x32xf32>, vector<32x16xf32>, vector<16x16xf32> -> vector<16x16xf32>
    %c0_53 = arith.constant 0 : index
    %c0_54 = arith.constant 0 : index
    %c0_55 = arith.constant 0 : index
    %117 = vector.load %arg4[%c0_53, %c0_54, %c0_55] : memref<4x16x16xf32, #tpu.memory_space<vmem>>, vector<1x16x16xf32>
    %118 = vector.shape_cast %117 : vector<1x16x16xf32> to vector<16x16xf32>
    %119 = vector.shape_cast %116 : vector<16x16xf32> to vector<1x16x16xf32>
    tpu.vector_store %arg4[%c0_53, %c0_54, %c0_55], %119 {strides = array<i32>} : memref<4x16x16xf32, #tpu.memory_space<vmem>>, vector<1x16x16xf32>,
    %c16_i32 = arith.constant 16 : i32
    %120 = arith.addi %0, %c16_i32 : i32
    %c0_i32_56 = arith.constant 0 : i32
    %121 = arith.addi %120, %c0_i32_56 : i32
    %122 = arith.index_cast %121 : i32 to index
    %123 = memref.load %arg1[%122] : memref<64xi32, #tpu.memory_space<smem>>
    %124 = arith.index_cast %123 : i32 to index
    %c0_57 = arith.constant 0 : index
    %125 = vector.load %arg2[%124, %c0_57] : memref<32x32xf32, #tpu.memory_space<vmem>>, vector<1x32xf32>
    %c0_58 = arith.constant 0 : index
    %c0_59 = arith.constant 0 : index
    %126 = vector.load %arg5[%c0_58, %c0_59] : memref<16x32xf32, #tpu.memory_space<vmem>>, vector<1x32xf32>
    tpu.vector_store %arg5[%c0_58, %c0_59], %125 {strides = array<i32>} : memref<16x32xf32, #tpu.memory_space<vmem>>, vector<1x32xf32>,
    %c16_i32_60 = arith.constant 16 : i32
    %127 = arith.addi %0, %c16_i32_60 : i32
    %c1_i32_61 = arith.constant 1 : i32
    %128 = arith.addi %127, %c1_i32_61 : i32
    %129 = arith.index_cast %128 : i32 to index
    %130 = memref.load %arg1[%129] : memref<64xi32, #tpu.memory_space<smem>>
    %131 = arith.index_cast %130 : i32 to index
    %c0_62 = arith.constant 0 : index
    %132 = vector.load %arg2[%131, %c0_62] : memref<32x32xf32, #tpu.memory_space<vmem>>, vector<1x32xf32>
    %c1_63 = arith.constant 1 : index
    %c0_64 = arith.constant 0 : index
    %133 = vector.load %arg5[%c1_63, %c0_64] : memref<16x32xf32, #tpu.memory_space<vmem>>, vector<1x32xf32>
    tpu.vector_store %arg5[%c1_63, %c0_64], %132 {strides = array<i32>} : memref<16x32xf32, #tpu.memory_space<vmem>>, vector<1x32xf32>,
    %c16_i32_65 = arith.constant 16 : i32
    %134 = arith.addi %0, %c16_i32_65 : i32
    %c2_i32_66 = arith.constant 2 : i32
    %135 = arith.addi %134, %c2_i32_66 : i32
    %136 = arith.index_cast %135 : i32 to index
    %137 = memref.load %arg1[%136] : memref<64xi32, #tpu.memory_space<smem>>
    %138 = arith.index_cast %137 : i32 to index
    %c0_67 = arith.constant 0 : index
    %139 = vector.load %arg2[%138, %c0_67] : memref<32x32xf32, #tpu.memory_space<vmem>>, vector<1x32xf32>
    %c2_68 = arith.constant 2 : index
    %c0_69 = arith.constant 0 : index
    %140 = vector.load %arg5[%c2_68, %c0_69] : memref<16x32xf32, #tpu.memory_space<vmem>>, vector<1x32xf32>
    tpu.vector_store %arg5[%c2_68, %c0_69], %139 {strides = array<i32>} : memref<16x32xf32, #tpu.memory_space<vmem>>, vector<1x32xf32>,
    %c16_i32_70 = arith.constant 16 : i32
    %141 = arith.addi %0, %c16_i32_70 : i32
    %c3_i32_71 = arith.constant 3 : i32
    %142 = arith.addi %141, %c3_i32_71 : i32
    %143 = arith.index_cast %142 : i32 to index
    %144 = memref.load %arg1[%143] : memref<64xi32, #tpu.memory_space<smem>>
    %145 = arith.index_cast %144 : i32 to index
    %c0_72 = arith.constant 0 : index
    %146 = vector.load %arg2[%145, %c0_72] : memref<32x32xf32, #tpu.memory_space<vmem>>, vector<1x32xf32>
    %c3_73 = arith.constant 3 : index
    %c0_74 = arith.constant 0 : index
    %147 = vector.load %arg5[%c3_73, %c0_74] : memref<16x32xf32, #tpu.memory_space<vmem>>, vector<1x32xf32>
    tpu.vector_store %arg5[%c3_73, %c0_74], %146 {strides = array<i32>} : memref<16x32xf32, #tpu.memory_space<vmem>>, vector<1x32xf32>,
    %c16_i32_75 = arith.constant 16 : i32
    %148 = arith.addi %0, %c16_i32_75 : i32
    %c4_i32_76 = arith.constant 4 : i32
    %149 = arith.addi %148, %c4_i32_76 : i32
    %150 = arith.index_cast %149 : i32 to index
    %151 = memref.load %arg1[%150] : memref<64xi32, #tpu.memory_space<smem>>
    %152 = arith.index_cast %151 : i32 to index
    %c0_77 = arith.constant 0 : index
    %153 = vector.load %arg2[%152, %c0_77] : memref<32x32xf32, #tpu.memory_space<vmem>>, vector<1x32xf32>
    %c4_78 = arith.constant 4 : index
    %c0_79 = arith.constant 0 : index
    %154 = vector.load %arg5[%c4_78, %c0_79] : memref<16x32xf32, #tpu.memory_space<vmem>>, vector<1x32xf32>
    tpu.vector_store %arg5[%c4_78, %c0_79], %153 {strides = array<i32>} : memref<16x32xf32, #tpu.memory_space<vmem>>, vector<1x32xf32>,
    %c16_i32_80 = arith.constant 16 : i32
    %155 = arith.addi %0, %c16_i32_80 : i32
    %c5_i32_81 = arith.constant 5 : i32
    %156 = arith.addi %155, %c5_i32_81 : i32
    %157 = arith.index_cast %156 : i32 to index
    %158 = memref.load %arg1[%157] : memref<64xi32, #tpu.memory_space<smem>>
    %159 = arith.index_cast %158 : i32 to index
    %c0_82 = arith.constant 0 : index
    %160 = vector.load %arg2[%159, %c0_82] : memref<32x32xf32, #tpu.memory_space<vmem>>, vector<1x32xf32>
    %c5_83 = arith.constant 5 : index
    %c0_84 = arith.constant 0 : index
    %161 = vector.load %arg5[%c5_83, %c0_84] : memref<16x32xf32, #tpu.memory_space<vmem>>, vector<1x32xf32>
    tpu.vector_store %arg5[%c5_83, %c0_84], %160 {strides = array<i32>} : memref<16x32xf32, #tpu.memory_space<vmem>>, vector<1x32xf32>,
    %c16_i32_85 = arith.constant 16 : i32
    %162 = arith.addi %0, %c16_i32_85 : i32
    %c6_i32_86 = arith.constant 6 : i32
    %163 = arith.addi %162, %c6_i32_86 : i32
    %164 = arith.index_cast %163 : i32 to index
    %165 = memref.load %arg1[%164] : memref<64xi32, #tpu.memory_space<smem>>
    %166 = arith.index_cast %165 : i32 to index
    %c0_87 = arith.constant 0 : index
    %167 = vector.load %arg2[%166, %c0_87] : memref<32x32xf32, #tpu.memory_space<vmem>>, vector<1x32xf32>
    %c6_88 = arith.constant 6 : index
    %c0_89 = arith.constant 0 : index
    %168 = vector.load %arg5[%c6_88, %c0_89] : memref<16x32xf32, #tpu.memory_space<vmem>>, vector<1x32xf32>
    tpu.vector_store %arg5[%c6_88, %c0_89], %167 {strides = array<i32>} : memref<16x32xf32, #tpu.memory_space<vmem>>, vector<1x32xf32>,
    %c16_i32_90 = arith.constant 16 : i32
    %169 = arith.addi %0, %c16_i32_90 : i32
    %c7_i32_91 = arith.constant 7 : i32
    %170 = arith.addi %169, %c7_i32_91 : i32
    %171 = arith.index_cast %170 : i32 to index
    %172 = memref.load %arg1[%171] : memref<64xi32, #tpu.memory_space<smem>>
    %173 = arith.index_cast %172 : i32 to index
    %c0_92 = arith.constant 0 : index
    %174 = vector.load %arg2[%173, %c0_92] : memref<32x32xf32, #tpu.memory_space<vmem>>, vector<1x32xf32>
    %c7_93 = arith.constant 7 : index
    %c0_94 = arith.constant 0 : index
    %175 = vector.load %arg5[%c7_93, %c0_94] : memref<16x32xf32, #tpu.memory_space<vmem>>, vector<1x32xf32>
    tpu.vector_store %arg5[%c7_93, %c0_94], %174 {strides = array<i32>} : memref<16x32xf32, #tpu.memory_space<vmem>>, vector<1x32xf32>,
    %c16_i32_95 = arith.constant 16 : i32
    %176 = arith.addi %0, %c16_i32_95 : i32
    %c8_i32_96 = arith.constant 8 : i32
    %177 = arith.addi %176, %c8_i32_96 : i32
    %178 = arith.index_cast %177 : i32 to index
    %179 = memref.load %arg1[%178] : memref<64xi32, #tpu.memory_space<smem>>
    %180 = arith.index_cast %179 : i32 to index
    %c0_97 = arith.constant 0 : index
    %181 = vector.load %arg2[%180, %c0_97] : memref<32x32xf32, #tpu.memory_space<vmem>>, vector<1x32xf32>
    %c8_98 = arith.constant 8 : index
    %c0_99 = arith.constant 0 : index
    %182 = vector.load %arg5[%c8_98, %c0_99] : memref<16x32xf32, #tpu.memory_space<vmem>>, vector<1x32xf32>
    tpu.vector_store %arg5[%c8_98, %c0_99], %181 {strides = array<i32>} : memref<16x32xf32, #tpu.memory_space<vmem>>, vector<1x32xf32>,
    %c16_i32_100 = arith.constant 16 : i32
    %183 = arith.addi %0, %c16_i32_100 : i32
    %c9_i32_101 = arith.constant 9 : i32
    %184 = arith.addi %183, %c9_i32_101 : i32
    %185 = arith.index_cast %184 : i32 to index
    %186 = memref.load %arg1[%185] : memref<64xi32, #tpu.memory_space<smem>>
    %187 = arith.index_cast %186 : i32 to index
    %c0_102 = arith.constant 0 : index
    %188 = vector.load %arg2[%187, %c0_102] : memref<32x32xf32, #tpu.memory_space<vmem>>, vector<1x32xf32>
    %c9_103 = arith.constant 9 : index
    %c0_104 = arith.constant 0 : index
    %189 = vector.load %arg5[%c9_103, %c0_104] : memref<16x32xf32, #tpu.memory_space<vmem>>, vector<1x32xf32>
    tpu.vector_store %arg5[%c9_103, %c0_104], %188 {strides = array<i32>} : memref<16x32xf32, #tpu.memory_space<vmem>>, vector<1x32xf32>,
    %c16_i32_105 = arith.constant 16 : i32
    %190 = arith.addi %0, %c16_i32_105 : i32
    %c10_i32_106 = arith.constant 10 : i32
    %191 = arith.addi %190, %c10_i32_106 : i32
    %192 = arith.index_cast %191 : i32 to index
    %193 = memref.load %arg1[%192] : memref<64xi32, #tpu.memory_space<smem>>
    %194 = arith.index_cast %193 : i32 to index
    %c0_107 = arith.constant 0 : index
    %195 = vector.load %arg2[%194, %c0_107] : memref<32x32xf32, #tpu.memory_space<vmem>>, vector<1x32xf32>
    %c10_108 = arith.constant 10 : index
    %c0_109 = arith.constant 0 : index
    %196 = vector.load %arg5[%c10_108, %c0_109] : memref<16x32xf32, #tpu.memory_space<vmem>>, vector<1x32xf32>
    tpu.vector_store %arg5[%c10_108, %c0_109], %195 {strides = array<i32>} : memref<16x32xf32, #tpu.memory_space<vmem>>, vector<1x32xf32>,
    %c16_i32_110 = arith.constant 16 : i32
    %197 = arith.addi %0, %c16_i32_110 : i32
    %c11_i32_111 = arith.constant 11 : i32
    %198 = arith.addi %197, %c11_i32_111 : i32
    %199 = arith.index_cast %198 : i32 to index
    %200 = memref.load %arg1[%199] : memref<64xi32, #tpu.memory_space<smem>>
    %201 = arith.index_cast %200 : i32 to index
    %c0_112 = arith.constant 0 : index
    %202 = vector.load %arg2[%201, %c0_112] : memref<32x32xf32, #tpu.memory_space<vmem>>, vector<1x32xf32>
    %c11_113 = arith.constant 11 : index
    %c0_114 = arith.constant 0 : index
    %203 = vector.load %arg5[%c11_113, %c0_114] : memref<16x32xf32, #tpu.memory_space<vmem>>, vector<1x32xf32>
    tpu.vector_store %arg5[%c11_113, %c0_114], %202 {strides = array<i32>} : memref<16x32xf32, #tpu.memory_space<vmem>>, vector<1x32xf32>,
    %c16_i32_115 = arith.constant 16 : i32
    %204 = arith.addi %0, %c16_i32_115 : i32
    %c12_i32_116 = arith.constant 12 : i32
    %205 = arith.addi %204, %c12_i32_116 : i32
    %206 = arith.index_cast %205 : i32 to index
    %207 = memref.load %arg1[%206] : memref<64xi32, #tpu.memory_space<smem>>
    %208 = arith.index_cast %207 : i32 to index
    %c0_117 = arith.constant 0 : index
    %209 = vector.load %arg2[%208, %c0_117] : memref<32x32xf32, #tpu.memory_space<vmem>>, vector<1x32xf32>
    %c12_118 = arith.constant 12 : index
    %c0_119 = arith.constant 0 : index
    %210 = vector.load %arg5[%c12_118, %c0_119] : memref<16x32xf32, #tpu.memory_space<vmem>>, vector<1x32xf32>
    tpu.vector_store %arg5[%c12_118, %c0_119], %209 {strides = array<i32>} : memref<16x32xf32, #tpu.memory_space<vmem>>, vector<1x32xf32>,
    %c16_i32_120 = arith.constant 16 : i32
    %211 = arith.addi %0, %c16_i32_120 : i32
    %c13_i32_121 = arith.constant 13 : i32
    %212 = arith.addi %211, %c13_i32_121 : i32
    %213 = arith.index_cast %212 : i32 to index
    %214 = memref.load %arg1[%213] : memref<64xi32, #tpu.memory_space<smem>>
    %215 = arith.index_cast %214 : i32 to index
    %c0_122 = arith.constant 0 : index
    %216 = vector.load %arg2[%215, %c0_122] : memref<32x32xf32, #tpu.memory_space<vmem>>, vector<1x32xf32>
    %c13_123 = arith.constant 13 : index
    %c0_124 = arith.constant 0 : index
    %217 = vector.load %arg5[%c13_123, %c0_124] : memref<16x32xf32, #tpu.memory_space<vmem>>, vector<1x32xf32>
    tpu.vector_store %arg5[%c13_123, %c0_124], %216 {strides = array<i32>} : memref<16x32xf32, #tpu.memory_space<vmem>>, vector<1x32xf32>,
    %c16_i32_125 = arith.constant 16 : i32
    %218 = arith.addi %0, %c16_i32_125 : i32
    %c14_i32_126 = arith.constant 14 : i32
    %219 = arith.addi %218, %c14_i32_126 : i32
    %220 = arith.index_cast %219 : i32 to index
    %221 = memref.load %arg1[%220] : memref<64xi32, #tpu.memory_space<smem>>
    %222 = arith.index_cast %221 : i32 to index
    %c0_127 = arith.constant 0 : index
    %223 = vector.load %arg2[%222, %c0_127] : memref<32x32xf32, #tpu.memory_space<vmem>>, vector<1x32xf32>
    %c14_128 = arith.constant 14 : index
    %c0_129 = arith.constant 0 : index
    %224 = vector.load %arg5[%c14_128, %c0_129] : memref<16x32xf32, #tpu.memory_space<vmem>>, vector<1x32xf32>
    tpu.vector_store %arg5[%c14_128, %c0_129], %223 {strides = array<i32>} : memref<16x32xf32, #tpu.memory_space<vmem>>, vector<1x32xf32>,
    %c16_i32_130 = arith.constant 16 : i32
    %225 = arith.addi %0, %c16_i32_130 : i32
    %c15_i32_131 = arith.constant 15 : i32
    %226 = arith.addi %225, %c15_i32_131 : i32
    %227 = arith.index_cast %226 : i32 to index
    %228 = memref.load %arg1[%227] : memref<64xi32, #tpu.memory_space<smem>>
    %229 = arith.index_cast %228 : i32 to index
    %c0_132 = arith.constant 0 : index
    %230 = vector.load %arg2[%229, %c0_132] : memref<32x32xf32, #tpu.memory_space<vmem>>, vector<1x32xf32>
    %c15_133 = arith.constant 15 : index
    %c0_134 = arith.constant 0 : index
    %231 = vector.load %arg5[%c15_133, %c0_134] : memref<16x32xf32, #tpu.memory_space<vmem>>, vector<1x32xf32>
    tpu.vector_store %arg5[%c15_133, %c0_134], %230 {strides = array<i32>} : memref<16x32xf32, #tpu.memory_space<vmem>>, vector<1x32xf32>,
    %c0_135 = arith.constant 0 : index
    %c0_136 = arith.constant 0 : index
    %232 = vector.load %arg5[%c0_135, %c0_136] : memref<16x32xf32, #tpu.memory_space<vmem>>, vector<16x32xf32>
    %c1_137 = arith.constant 1 : index
    %c0_138 = arith.constant 0 : index
    %c0_139 = arith.constant 0 : index
    %233 = vector.load %arg3[%c1_137, %c0_138, %c0_139] : memref<4x32x16xf32, #tpu.memory_space<vmem>>, vector<1x32x16xf32>
    %234 = vector.shape_cast %233 : vector<1x32x16xf32> to vector<32x16xf32>
    %cst_140 = arith.constant dense<0.000000e+00> : vector<16x16xf32>
    %235 = tpu.matmul %232, %234, %cst_140 {dimension_numbers = #tpu.dot_dimension_numbers<[1], [0], [0], [1], [0, 0, 1, 1], [], []>} : vector<16x32xf32>, vector<32x16xf32>, vector<16x16xf32> -> vector<16x16xf32>
    %c1_141 = arith.constant 1 : index
    %c0_142 = arith.constant 0 : index
    %c0_143 = arith.constant 0 : index
    %236 = vector.load %arg4[%c1_141, %c0_142, %c0_143] : memref<4x16x16xf32, #tpu.memory_space<vmem>>, vector<1x16x16xf32>
    %237 = vector.shape_cast %236 : vector<1x16x16xf32> to vector<16x16xf32>
    %238 = vector.shape_cast %235 : vector<16x16xf32> to vector<1x16x16xf32>
    tpu.vector_store %arg4[%c1_141, %c0_142, %c0_143], %238 {strides = array<i32>} : memref<4x16x16xf32, #tpu.memory_space<vmem>>, vector<1x16x16xf32>,
    %c32_i32 = arith.constant 32 : i32
    %239 = arith.addi %0, %c32_i32 : i32
    %c0_i32_144 = arith.constant 0 : i32
    %240 = arith.addi %239, %c0_i32_144 : i32
    %241 = arith.index_cast %240 : i32 to index
    %242 = memref.load %arg1[%241] : memref<64xi32, #tpu.memory_space<smem>>
    %243 = arith.index_cast %242 : i32 to index
    %c0_145 = arith.constant 0 : index
    %244 = vector.load %arg2[%243, %c0_145] : memref<32x32xf32, #tpu.memory_space<vmem>>, vector<1x32xf32>
    %c0_146 = arith.constant 0 : index
    %c0_147 = arith.constant 0 : index
    %245 = vector.load %arg5[%c0_146, %c0_147] : memref<16x32xf32, #tpu.memory_space<vmem>>, vector<1x32xf32>
    tpu.vector_store %arg5[%c0_146, %c0_147], %244 {strides = array<i32>} : memref<16x32xf32, #tpu.memory_space<vmem>>, vector<1x32xf32>,
    %c32_i32_148 = arith.constant 32 : i32
    %246 = arith.addi %0, %c32_i32_148 : i32
    %c1_i32_149 = arith.constant 1 : i32
    %247 = arith.addi %246, %c1_i32_149 : i32
    %248 = arith.index_cast %247 : i32 to index
    %249 = memref.load %arg1[%248] : memref<64xi32, #tpu.memory_space<smem>>
    %250 = arith.index_cast %249 : i32 to index
    %c0_150 = arith.constant 0 : index
    %251 = vector.load %arg2[%250, %c0_150] : memref<32x32xf32, #tpu.memory_space<vmem>>, vector<1x32xf32>
    %c1_151 = arith.constant 1 : index
    %c0_152 = arith.constant 0 : index
    %252 = vector.load %arg5[%c1_151, %c0_152] : memref<16x32xf32, #tpu.memory_space<vmem>>, vector<1x32xf32>
    tpu.vector_store %arg5[%c1_151, %c0_152], %251 {strides = array<i32>} : memref<16x32xf32, #tpu.memory_space<vmem>>, vector<1x32xf32>,
    %c32_i32_153 = arith.constant 32 : i32
    %253 = arith.addi %0, %c32_i32_153 : i32
    %c2_i32_154 = arith.constant 2 : i32
    %254 = arith.addi %253, %c2_i32_154 : i32
    %255 = arith.index_cast %254 : i32 to index
    %256 = memref.load %arg1[%255] : memref<64xi32, #tpu.memory_space<smem>>
    %257 = arith.index_cast %256 : i32 to index
    %c0_155 = arith.constant 0 : index
    %258 = vector.load %arg2[%257, %c0_155] : memref<32x32xf32, #tpu.memory_space<vmem>>, vector<1x32xf32>
    %c2_156 = arith.constant 2 : index
    %c0_157 = arith.constant 0 : index
    %259 = vector.load %arg5[%c2_156, %c0_157] : memref<16x32xf32, #tpu.memory_space<vmem>>, vector<1x32xf32>
    tpu.vector_store %arg5[%c2_156, %c0_157], %258 {strides = array<i32>} : memref<16x32xf32, #tpu.memory_space<vmem>>, vector<1x32xf32>,
    %c32_i32_158 = arith.constant 32 : i32
    %260 = arith.addi %0, %c32_i32_158 : i32
    %c3_i32_159 = arith.constant 3 : i32
    %261 = arith.addi %260, %c3_i32_159 : i32
    %262 = arith.index_cast %261 : i32 to index
    %263 = memref.load %arg1[%262] : memref<64xi32, #tpu.memory_space<smem>>
    %264 = arith.index_cast %263 : i32 to index
    %c0_160 = arith.constant 0 : index
    %265 = vector.load %arg2[%264, %c0_160] : memref<32x32xf32, #tpu.memory_space<vmem>>, vector<1x32xf32>
    %c3_161 = arith.constant 3 : index
    %c0_162 = arith.constant 0 : index
    %266 = vector.load %arg5[%c3_161, %c0_162] : memref<16x32xf32, #tpu.memory_space<vmem>>, vector<1x32xf32>
    tpu.vector_store %arg5[%c3_161, %c0_162], %265 {strides = array<i32>} : memref<16x32xf32, #tpu.memory_space<vmem>>, vector<1x32xf32>,
    %c32_i32_163 = arith.constant 32 : i32
    %267 = arith.addi %0, %c32_i32_163 : i32
    %c4_i32_164 = arith.constant 4 : i32
    %268 = arith.addi %267, %c4_i32_164 : i32
    %269 = arith.index_cast %268 : i32 to index
    %270 = memref.load %arg1[%269] : memref<64xi32, #tpu.memory_space<smem>>
    %271 = arith.index_cast %270 : i32 to index
    %c0_165 = arith.constant 0 : index
    %272 = vector.load %arg2[%271, %c0_165] : memref<32x32xf32, #tpu.memory_space<vmem>>, vector<1x32xf32>
    %c4_166 = arith.constant 4 : index
    %c0_167 = arith.constant 0 : index
    %273 = vector.load %arg5[%c4_166, %c0_167] : memref<16x32xf32, #tpu.memory_space<vmem>>, vector<1x32xf32>
    tpu.vector_store %arg5[%c4_166, %c0_167], %272 {strides = array<i32>} : memref<16x32xf32, #tpu.memory_space<vmem>>, vector<1x32xf32>,
    %c32_i32_168 = arith.constant 32 : i32
    %274 = arith.addi %0, %c32_i32_168 : i32
    %c5_i32_169 = arith.constant 5 : i32
    %275 = arith.addi %274, %c5_i32_169 : i32
    %276 = arith.index_cast %275 : i32 to index
    %277 = memref.load %arg1[%276] : memref<64xi32, #tpu.memory_space<smem>>
    %278 = arith.index_cast %277 : i32 to index
    %c0_170 = arith.constant 0 : index
    %279 = vector.load %arg2[%278, %c0_170] : memref<32x32xf32, #tpu.memory_space<vmem>>, vector<1x32xf32>
    %c5_171 = arith.constant 5 : index
    %c0_172 = arith.constant 0 : index
    %280 = vector.load %arg5[%c5_171, %c0_172] : memref<16x32xf32, #tpu.memory_space<vmem>>, vector<1x32xf32>
    tpu.vector_store %arg5[%c5_171, %c0_172], %279 {strides = array<i32>} : memref<16x32xf32, #tpu.memory_space<vmem>>, vector<1x32xf32>,
    %c32_i32_173 = arith.constant 32 : i32
    %281 = arith.addi %0, %c32_i32_173 : i32
    %c6_i32_174 = arith.constant 6 : i32
    %282 = arith.addi %281, %c6_i32_174 : i32
    %283 = arith.index_cast %282 : i32 to index
    %284 = memref.load %arg1[%283] : memref<64xi32, #tpu.memory_space<smem>>
    %285 = arith.index_cast %284 : i32 to index
    %c0_175 = arith.constant 0 : index
    %286 = vector.load %arg2[%285, %c0_175] : memref<32x32xf32, #tpu.memory_space<vmem>>, vector<1x32xf32>
    %c6_176 = arith.constant 6 : index
    %c0_177 = arith.constant 0 : index
    %287 = vector.load %arg5[%c6_176, %c0_177] : memref<16x32xf32, #tpu.memory_space<vmem>>, vector<1x32xf32>
    tpu.vector_store %arg5[%c6_176, %c0_177], %286 {strides = array<i32>} : memref<16x32xf32, #tpu.memory_space<vmem>>, vector<1x32xf32>,
    %c32_i32_178 = arith.constant 32 : i32
    %288 = arith.addi %0, %c32_i32_178 : i32
    %c7_i32_179 = arith.constant 7 : i32
    %289 = arith.addi %288, %c7_i32_179 : i32
    %290 = arith.index_cast %289 : i32 to index
    %291 = memref.load %arg1[%290] : memref<64xi32, #tpu.memory_space<smem>>
    %292 = arith.index_cast %291 : i32 to index
    %c0_180 = arith.constant 0 : index
    %293 = vector.load %arg2[%292, %c0_180] : memref<32x32xf32, #tpu.memory_space<vmem>>, vector<1x32xf32>
    %c7_181 = arith.constant 7 : index
    %c0_182 = arith.constant 0 : index
    %294 = vector.load %arg5[%c7_181, %c0_182] : memref<16x32xf32, #tpu.memory_space<vmem>>, vector<1x32xf32>
    tpu.vector_store %arg5[%c7_181, %c0_182], %293 {strides = array<i32>} : memref<16x32xf32, #tpu.memory_space<vmem>>, vector<1x32xf32>,
    %c32_i32_183 = arith.constant 32 : i32
    %295 = arith.addi %0, %c32_i32_183 : i32
    %c8_i32_184 = arith.constant 8 : i32
    %296 = arith.addi %295, %c8_i32_184 : i32
    %297 = arith.index_cast %296 : i32 to index
    %298 = memref.load %arg1[%297] : memref<64xi32, #tpu.memory_space<smem>>
    %299 = arith.index_cast %298 : i32 to index
    %c0_185 = arith.constant 0 : index
    %300 = vector.load %arg2[%299, %c0_185] : memref<32x32xf32, #tpu.memory_space<vmem>>, vector<1x32xf32>
    %c8_186 = arith.constant 8 : index
    %c0_187 = arith.constant 0 : index
    %301 = vector.load %arg5[%c8_186, %c0_187] : memref<16x32xf32, #tpu.memory_space<vmem>>, vector<1x32xf32>
    tpu.vector_store %arg5[%c8_186, %c0_187], %300 {strides = array<i32>} : memref<16x32xf32, #tpu.memory_space<vmem>>, vector<1x32xf32>,
    %c32_i32_188 = arith.constant 32 : i32
    %302 = arith.addi %0, %c32_i32_188 : i32
    %c9_i32_189 = arith.constant 9 : i32
    %303 = arith.addi %302, %c9_i32_189 : i32
    %304 = arith.index_cast %303 : i32 to index
    %305 = memref.load %arg1[%304] : memref<64xi32, #tpu.memory_space<smem>>
    %306 = arith.index_cast %305 : i32 to index
    %c0_190 = arith.constant 0 : index
    %307 = vector.load %arg2[%306, %c0_190] : memref<32x32xf32, #tpu.memory_space<vmem>>, vector<1x32xf32>
    %c9_191 = arith.constant 9 : index
    %c0_192 = arith.constant 0 : index
    %308 = vector.load %arg5[%c9_191, %c0_192] : memref<16x32xf32, #tpu.memory_space<vmem>>, vector<1x32xf32>
    tpu.vector_store %arg5[%c9_191, %c0_192], %307 {strides = array<i32>} : memref<16x32xf32, #tpu.memory_space<vmem>>, vector<1x32xf32>,
    %c32_i32_193 = arith.constant 32 : i32
    %309 = arith.addi %0, %c32_i32_193 : i32
    %c10_i32_194 = arith.constant 10 : i32
    %310 = arith.addi %309, %c10_i32_194 : i32
    %311 = arith.index_cast %310 : i32 to index
    %312 = memref.load %arg1[%311] : memref<64xi32, #tpu.memory_space<smem>>
    %313 = arith.index_cast %312 : i32 to index
    %c0_195 = arith.constant 0 : index
    %314 = vector.load %arg2[%313, %c0_195] : memref<32x32xf32, #tpu.memory_space<vmem>>, vector<1x32xf32>
    %c10_196 = arith.constant 10 : index
    %c0_197 = arith.constant 0 : index
    %315 = vector.load %arg5[%c10_196, %c0_197] : memref<16x32xf32, #tpu.memory_space<vmem>>, vector<1x32xf32>
    tpu.vector_store %arg5[%c10_196, %c0_197], %314 {strides = array<i32>} : memref<16x32xf32, #tpu.memory_space<vmem>>, vector<1x32xf32>,
    %c32_i32_198 = arith.constant 32 : i32
    %316 = arith.addi %0, %c32_i32_198 : i32
    %c11_i32_199 = arith.constant 11 : i32
    %317 = arith.addi %316, %c11_i32_199 : i32
    %318 = arith.index_cast %317 : i32 to index
    %319 = memref.load %arg1[%318] : memref<64xi32, #tpu.memory_space<smem>>
    %320 = arith.index_cast %319 : i32 to index
    %c0_200 = arith.constant 0 : index
    %321 = vector.load %arg2[%320, %c0_200] : memref<32x32xf32, #tpu.memory_space<vmem>>, vector<1x32xf32>
    %c11_201 = arith.constant 11 : index
    %c0_202 = arith.constant 0 : index
    %322 = vector.load %arg5[%c11_201, %c0_202] : memref<16x32xf32, #tpu.memory_space<vmem>>, vector<1x32xf32>
    tpu.vector_store %arg5[%c11_201, %c0_202], %321 {strides = array<i32>} : memref<16x32xf32, #tpu.memory_space<vmem>>, vector<1x32xf32>,
    %c32_i32_203 = arith.constant 32 : i32
    %323 = arith.addi %0, %c32_i32_203 : i32
    %c12_i32_204 = arith.constant 12 : i32
    %324 = arith.addi %323, %c12_i32_204 : i32
    %325 = arith.index_cast %324 : i32 to index
    %326 = memref.load %arg1[%325] : memref<64xi32, #tpu.memory_space<smem>>
    %327 = arith.index_cast %326 : i32 to index
    %c0_205 = arith.constant 0 : index
    %328 = vector.load %arg2[%327, %c0_205] : memref<32x32xf32, #tpu.memory_space<vmem>>, vector<1x32xf32>
    %c12_206 = arith.constant 12 : index
    %c0_207 = arith.constant 0 : index
    %329 = vector.load %arg5[%c12_206, %c0_207] : memref<16x32xf32, #tpu.memory_space<vmem>>, vector<1x32xf32>
    tpu.vector_store %arg5[%c12_206, %c0_207], %328 {strides = array<i32>} : memref<16x32xf32, #tpu.memory_space<vmem>>, vector<1x32xf32>,
    %c32_i32_208 = arith.constant 32 : i32
    %330 = arith.addi %0, %c32_i32_208 : i32
    %c13_i32_209 = arith.constant 13 : i32
    %331 = arith.addi %330, %c13_i32_209 : i32
    %332 = arith.index_cast %331 : i32 to index
    %333 = memref.load %arg1[%332] : memref<64xi32, #tpu.memory_space<smem>>
    %334 = arith.index_cast %333 : i32 to index
    %c0_210 = arith.constant 0 : index
    %335 = vector.load %arg2[%334, %c0_210] : memref<32x32xf32, #tpu.memory_space<vmem>>, vector<1x32xf32>
    %c13_211 = arith.constant 13 : index
    %c0_212 = arith.constant 0 : index
    %336 = vector.load %arg5[%c13_211, %c0_212] : memref<16x32xf32, #tpu.memory_space<vmem>>, vector<1x32xf32>
    tpu.vector_store %arg5[%c13_211, %c0_212], %335 {strides = array<i32>} : memref<16x32xf32, #tpu.memory_space<vmem>>, vector<1x32xf32>,
    %c32_i32_213 = arith.constant 32 : i32
    %337 = arith.addi %0, %c32_i32_213 : i32
    %c14_i32_214 = arith.constant 14 : i32
    %338 = arith.addi %337, %c14_i32_214 : i32
    %339 = arith.index_cast %338 : i32 to index
    %340 = memref.load %arg1[%339] : memref<64xi32, #tpu.memory_space<smem>>
    %341 = arith.index_cast %340 : i32 to index
    %c0_215 = arith.constant 0 : index
    %342 = vector.load %arg2[%341, %c0_215] : memref<32x32xf32, #tpu.memory_space<vmem>>, vector<1x32xf32>
    %c14_216 = arith.constant 14 : index
    %c0_217 = arith.constant 0 : index
    %343 = vector.load %arg5[%c14_216, %c0_217] : memref<16x32xf32, #tpu.memory_space<vmem>>, vector<1x32xf32>
    tpu.vector_store %arg5[%c14_216, %c0_217], %342 {strides = array<i32>} : memref<16x32xf32, #tpu.memory_space<vmem>>, vector<1x32xf32>,
    %c32_i32_218 = arith.constant 32 : i32
    %344 = arith.addi %0, %c32_i32_218 : i32
    %c15_i32_219 = arith.constant 15 : i32
    %345 = arith.addi %344, %c15_i32_219 : i32
    %346 = arith.index_cast %345 : i32 to index
    %347 = memref.load %arg1[%346] : memref<64xi32, #tpu.memory_space<smem>>
    %348 = arith.index_cast %347 : i32 to index
    %c0_220 = arith.constant 0 : index
    %349 = vector.load %arg2[%348, %c0_220] : memref<32x32xf32, #tpu.memory_space<vmem>>, vector<1x32xf32>
    %c15_221 = arith.constant 15 : index
    %c0_222 = arith.constant 0 : index
    %350 = vector.load %arg5[%c15_221, %c0_222] : memref<16x32xf32, #tpu.memory_space<vmem>>, vector<1x32xf32>
    tpu.vector_store %arg5[%c15_221, %c0_222], %349 {strides = array<i32>} : memref<16x32xf32, #tpu.memory_space<vmem>>, vector<1x32xf32>,
    %c0_223 = arith.constant 0 : index
    %c0_224 = arith.constant 0 : index
    %351 = vector.load %arg5[%c0_223, %c0_224] : memref<16x32xf32, #tpu.memory_space<vmem>>, vector<16x32xf32>
    %c2_225 = arith.constant 2 : index
    %c0_226 = arith.constant 0 : index
    %c0_227 = arith.constant 0 : index
    %352 = vector.load %arg3[%c2_225, %c0_226, %c0_227] : memref<4x32x16xf32, #tpu.memory_space<vmem>>, vector<1x32x16xf32>
    %353 = vector.shape_cast %352 : vector<1x32x16xf32> to vector<32x16xf32>
    %cst_228 = arith.constant dense<0.000000e+00> : vector<16x16xf32>
    %354 = tpu.matmul %351, %353, %cst_228 {dimension_numbers = #tpu.dot_dimension_numbers<[1], [0], [0], [1], [0, 0, 1, 1], [], []>} : vector<16x32xf32>, vector<32x16xf32>, vector<16x16xf32> -> vector<16x16xf32>
    %c2_229 = arith.constant 2 : index
    %c0_230 = arith.constant 0 : index
    %c0_231 = arith.constant 0 : index
    %355 = vector.load %arg4[%c2_229, %c0_230, %c0_231] : memref<4x16x16xf32, #tpu.memory_space<vmem>>, vector<1x16x16xf32>
    %356 = vector.shape_cast %355 : vector<1x16x16xf32> to vector<16x16xf32>
    %357 = vector.shape_cast %354 : vector<16x16xf32> to vector<1x16x16xf32>
    tpu.vector_store %arg4[%c2_229, %c0_230, %c0_231], %357 {strides = array<i32>} : memref<4x16x16xf32, #tpu.memory_space<vmem>>, vector<1x16x16xf32>,
    %c48_i32 = arith.constant 48 : i32
    %358 = arith.addi %0, %c48_i32 : i32
    %c0_i32_232 = arith.constant 0 : i32
    %359 = arith.addi %358, %c0_i32_232 : i32
    %360 = arith.index_cast %359 : i32 to index
    %361 = memref.load %arg1[%360] : memref<64xi32, #tpu.memory_space<smem>>
    %362 = arith.index_cast %361 : i32 to index
    %c0_233 = arith.constant 0 : index
    %363 = vector.load %arg2[%362, %c0_233] : memref<32x32xf32, #tpu.memory_space<vmem>>, vector<1x32xf32>
    %c0_234 = arith.constant 0 : index
    %c0_235 = arith.constant 0 : index
    %364 = vector.load %arg5[%c0_234, %c0_235] : memref<16x32xf32, #tpu.memory_space<vmem>>, vector<1x32xf32>
    tpu.vector_store %arg5[%c0_234, %c0_235], %363 {strides = array<i32>} : memref<16x32xf32, #tpu.memory_space<vmem>>, vector<1x32xf32>,
    %c48_i32_236 = arith.constant 48 : i32
    %365 = arith.addi %0, %c48_i32_236 : i32
    %c1_i32_237 = arith.constant 1 : i32
    %366 = arith.addi %365, %c1_i32_237 : i32
    %367 = arith.index_cast %366 : i32 to index
    %368 = memref.load %arg1[%367] : memref<64xi32, #tpu.memory_space<smem>>
    %369 = arith.index_cast %368 : i32 to index
    %c0_238 = arith.constant 0 : index
    %370 = vector.load %arg2[%369, %c0_238] : memref<32x32xf32, #tpu.memory_space<vmem>>, vector<1x32xf32>
    %c1_239 = arith.constant 1 : index
    %c0_240 = arith.constant 0 : index
    %371 = vector.load %arg5[%c1_239, %c0_240] : memref<16x32xf32, #tpu.memory_space<vmem>>, vector<1x32xf32>
    tpu.vector_store %arg5[%c1_239, %c0_240], %370 {strides = array<i32>} : memref<16x32xf32, #tpu.memory_space<vmem>>, vector<1x32xf32>,
    %c48_i32_241 = arith.constant 48 : i32
    %372 = arith.addi %0, %c48_i32_241 : i32
    %c2_i32_242 = arith.constant 2 : i32
    %373 = arith.addi %372, %c2_i32_242 : i32
    %374 = arith.index_cast %373 : i32 to index
    %375 = memref.load %arg1[%374] : memref<64xi32, #tpu.memory_space<smem>>
    %376 = arith.index_cast %375 : i32 to index
    %c0_243 = arith.constant 0 : index
    %377 = vector.load %arg2[%376, %c0_243] : memref<32x32xf32, #tpu.memory_space<vmem>>, vector<1x32xf32>
    %c2_244 = arith.constant 2 : index
    %c0_245 = arith.constant 0 : index
    %378 = vector.load %arg5[%c2_244, %c0_245] : memref<16x32xf32, #tpu.memory_space<vmem>>, vector<1x32xf32>
    tpu.vector_store %arg5[%c2_244, %c0_245], %377 {strides = array<i32>} : memref<16x32xf32, #tpu.memory_space<vmem>>, vector<1x32xf32>,
    %c48_i32_246 = arith.constant 48 : i32
    %379 = arith.addi %0, %c48_i32_246 : i32
    %c3_i32_247 = arith.constant 3 : i32
    %380 = arith.addi %379, %c3_i32_247 : i32
    %381 = arith.index_cast %380 : i32 to index
    %382 = memref.load %arg1[%381] : memref<64xi32, #tpu.memory_space<smem>>
    %383 = arith.index_cast %382 : i32 to index
    %c0_248 = arith.constant 0 : index
    %384 = vector.load %arg2[%383, %c0_248] : memref<32x32xf32, #tpu.memory_space<vmem>>, vector<1x32xf32>
    %c3_249 = arith.constant 3 : index
    %c0_250 = arith.constant 0 : index
    %385 = vector.load %arg5[%c3_249, %c0_250] : memref<16x32xf32, #tpu.memory_space<vmem>>, vector<1x32xf32>
    tpu.vector_store %arg5[%c3_249, %c0_250], %384 {strides = array<i32>} : memref<16x32xf32, #tpu.memory_space<vmem>>, vector<1x32xf32>,
    %c48_i32_251 = arith.constant 48 : i32
    %386 = arith.addi %0, %c48_i32_251 : i32
    %c4_i32_252 = arith.constant 4 : i32
    %387 = arith.addi %386, %c4_i32_252 : i32
    %388 = arith.index_cast %387 : i32 to index
    %389 = memref.load %arg1[%388] : memref<64xi32, #tpu.memory_space<smem>>
    %390 = arith.index_cast %389 : i32 to index
    %c0_253 = arith.constant 0 : index
    %391 = vector.load %arg2[%390, %c0_253] : memref<32x32xf32, #tpu.memory_space<vmem>>, vector<1x32xf32>
    %c4_254 = arith.constant 4 : index
    %c0_255 = arith.constant 0 : index
    %392 = vector.load %arg5[%c4_254, %c0_255] : memref<16x32xf32, #tpu.memory_space<vmem>>, vector<1x32xf32>
    tpu.vector_store %arg5[%c4_254, %c0_255], %391 {strides = array<i32>} : memref<16x32xf32, #tpu.memory_space<vmem>>, vector<1x32xf32>,
    %c48_i32_256 = arith.constant 48 : i32
    %393 = arith.addi %0, %c48_i32_256 : i32
    %c5_i32_257 = arith.constant 5 : i32
    %394 = arith.addi %393, %c5_i32_257 : i32
    %395 = arith.index_cast %394 : i32 to index
    %396 = memref.load %arg1[%395] : memref<64xi32, #tpu.memory_space<smem>>
    %397 = arith.index_cast %396 : i32 to index
    %c0_258 = arith.constant 0 : index
    %398 = vector.load %arg2[%397, %c0_258] : memref<32x32xf32, #tpu.memory_space<vmem>>, vector<1x32xf32>
    %c5_259 = arith.constant 5 : index
    %c0_260 = arith.constant 0 : index
    %399 = vector.load %arg5[%c5_259, %c0_260] : memref<16x32xf32, #tpu.memory_space<vmem>>, vector<1x32xf32>
    tpu.vector_store %arg5[%c5_259, %c0_260], %398 {strides = array<i32>} : memref<16x32xf32, #tpu.memory_space<vmem>>, vector<1x32xf32>,
    %c48_i32_261 = arith.constant 48 : i32
    %400 = arith.addi %0, %c48_i32_261 : i32
    %c6_i32_262 = arith.constant 6 : i32
    %401 = arith.addi %400, %c6_i32_262 : i32
    %402 = arith.index_cast %401 : i32 to index
    %403 = memref.load %arg1[%402] : memref<64xi32, #tpu.memory_space<smem>>
    %404 = arith.index_cast %403 : i32 to index
    %c0_263 = arith.constant 0 : index
    %405 = vector.load %arg2[%404, %c0_263] : memref<32x32xf32, #tpu.memory_space<vmem>>, vector<1x32xf32>
    %c6_264 = arith.constant 6 : index
    %c0_265 = arith.constant 0 : index
    %406 = vector.load %arg5[%c6_264, %c0_265] : memref<16x32xf32, #tpu.memory_space<vmem>>, vector<1x32xf32>
    tpu.vector_store %arg5[%c6_264, %c0_265], %405 {strides = array<i32>} : memref<16x32xf32, #tpu.memory_space<vmem>>, vector<1x32xf32>,
    %c48_i32_266 = arith.constant 48 : i32
    %407 = arith.addi %0, %c48_i32_266 : i32
    %c7_i32_267 = arith.constant 7 : i32
    %408 = arith.addi %407, %c7_i32_267 : i32
    %409 = arith.index_cast %408 : i32 to index
    %410 = memref.load %arg1[%409] : memref<64xi32, #tpu.memory_space<smem>>
    %411 = arith.index_cast %410 : i32 to index
    %c0_268 = arith.constant 0 : index
    %412 = vector.load %arg2[%411, %c0_268] : memref<32x32xf32, #tpu.memory_space<vmem>>, vector<1x32xf32>
    %c7_269 = arith.constant 7 : index
    %c0_270 = arith.constant 0 : index
    %413 = vector.load %arg5[%c7_269, %c0_270] : memref<16x32xf32, #tpu.memory_space<vmem>>, vector<1x32xf32>
    tpu.vector_store %arg5[%c7_269, %c0_270], %412 {strides = array<i32>} : memref<16x32xf32, #tpu.memory_space<vmem>>, vector<1x32xf32>,
    %c48_i32_271 = arith.constant 48 : i32
    %414 = arith.addi %0, %c48_i32_271 : i32
    %c8_i32_272 = arith.constant 8 : i32
    %415 = arith.addi %414, %c8_i32_272 : i32
    %416 = arith.index_cast %415 : i32 to index
    %417 = memref.load %arg1[%416] : memref<64xi32, #tpu.memory_space<smem>>
    %418 = arith.index_cast %417 : i32 to index
    %c0_273 = arith.constant 0 : index
    %419 = vector.load %arg2[%418, %c0_273] : memref<32x32xf32, #tpu.memory_space<vmem>>, vector<1x32xf32>
    %c8_274 = arith.constant 8 : index
    %c0_275 = arith.constant 0 : index
    %420 = vector.load %arg5[%c8_274, %c0_275] : memref<16x32xf32, #tpu.memory_space<vmem>>, vector<1x32xf32>
    tpu.vector_store %arg5[%c8_274, %c0_275], %419 {strides = array<i32>} : memref<16x32xf32, #tpu.memory_space<vmem>>, vector<1x32xf32>,
    %c48_i32_276 = arith.constant 48 : i32
    %421 = arith.addi %0, %c48_i32_276 : i32
    %c9_i32_277 = arith.constant 9 : i32
    %422 = arith.addi %421, %c9_i32_277 : i32
    %423 = arith.index_cast %422 : i32 to index
    %424 = memref.load %arg1[%423] : memref<64xi32, #tpu.memory_space<smem>>
    %425 = arith.index_cast %424 : i32 to index
    %c0_278 = arith.constant 0 : index
    %426 = vector.load %arg2[%425, %c0_278] : memref<32x32xf32, #tpu.memory_space<vmem>>, vector<1x32xf32>
    %c9_279 = arith.constant 9 : index
    %c0_280 = arith.constant 0 : index
    %427 = vector.load %arg5[%c9_279, %c0_280] : memref<16x32xf32, #tpu.memory_space<vmem>>, vector<1x32xf32>
    tpu.vector_store %arg5[%c9_279, %c0_280], %426 {strides = array<i32>} : memref<16x32xf32, #tpu.memory_space<vmem>>, vector<1x32xf32>,
    %c48_i32_281 = arith.constant 48 : i32
    %428 = arith.addi %0, %c48_i32_281 : i32
    %c10_i32_282 = arith.constant 10 : i32
    %429 = arith.addi %428, %c10_i32_282 : i32
    %430 = arith.index_cast %429 : i32 to index
    %431 = memref.load %arg1[%430] : memref<64xi32, #tpu.memory_space<smem>>
    %432 = arith.index_cast %431 : i32 to index
    %c0_283 = arith.constant 0 : index
    %433 = vector.load %arg2[%432, %c0_283] : memref<32x32xf32, #tpu.memory_space<vmem>>, vector<1x32xf32>
    %c10_284 = arith.constant 10 : index
    %c0_285 = arith.constant 0 : index
    %434 = vector.load %arg5[%c10_284, %c0_285] : memref<16x32xf32, #tpu.memory_space<vmem>>, vector<1x32xf32>
    tpu.vector_store %arg5[%c10_284, %c0_285], %433 {strides = array<i32>} : memref<16x32xf32, #tpu.memory_space<vmem>>, vector<1x32xf32>,
    %c48_i32_286 = arith.constant 48 : i32
    %435 = arith.addi %0, %c48_i32_286 : i32
    %c11_i32_287 = arith.constant 11 : i32
    %436 = arith.addi %435, %c11_i32_287 : i32
    %437 = arith.index_cast %436 : i32 to index
    %438 = memref.load %arg1[%437] : memref<64xi32, #tpu.memory_space<smem>>
    %439 = arith.index_cast %438 : i32 to index
    %c0_288 = arith.constant 0 : index
    %440 = vector.load %arg2[%439, %c0_288] : memref<32x32xf32, #tpu.memory_space<vmem>>, vector<1x32xf32>
    %c11_289 = arith.constant 11 : index
    %c0_290 = arith.constant 0 : index
    %441 = vector.load %arg5[%c11_289, %c0_290] : memref<16x32xf32, #tpu.memory_space<vmem>>, vector<1x32xf32>
    tpu.vector_store %arg5[%c11_289, %c0_290], %440 {strides = array<i32>} : memref<16x32xf32, #tpu.memory_space<vmem>>, vector<1x32xf32>,
    %c48_i32_291 = arith.constant 48 : i32
    %442 = arith.addi %0, %c48_i32_291 : i32
    %c12_i32_292 = arith.constant 12 : i32
    %443 = arith.addi %442, %c12_i32_292 : i32
    %444 = arith.index_cast %443 : i32 to index
    %445 = memref.load %arg1[%444] : memref<64xi32, #tpu.memory_space<smem>>
    %446 = arith.index_cast %445 : i32 to index
    %c0_293 = arith.constant 0 : index
    %447 = vector.load %arg2[%446, %c0_293] : memref<32x32xf32, #tpu.memory_space<vmem>>, vector<1x32xf32>
    %c12_294 = arith.constant 12 : index
    %c0_295 = arith.constant 0 : index
    %448 = vector.load %arg5[%c12_294, %c0_295] : memref<16x32xf32, #tpu.memory_space<vmem>>, vector<1x32xf32>
    tpu.vector_store %arg5[%c12_294, %c0_295], %447 {strides = array<i32>} : memref<16x32xf32, #tpu.memory_space<vmem>>, vector<1x32xf32>,
    %c48_i32_296 = arith.constant 48 : i32
    %449 = arith.addi %0, %c48_i32_296 : i32
    %c13_i32_297 = arith.constant 13 : i32
    %450 = arith.addi %449, %c13_i32_297 : i32
    %451 = arith.index_cast %450 : i32 to index
    %452 = memref.load %arg1[%451] : memref<64xi32, #tpu.memory_space<smem>>
    %453 = arith.index_cast %452 : i32 to index
    %c0_298 = arith.constant 0 : index
    %454 = vector.load %arg2[%453, %c0_298] : memref<32x32xf32, #tpu.memory_space<vmem>>, vector<1x32xf32>
    %c13_299 = arith.constant 13 : index
    %c0_300 = arith.constant 0 : index
    %455 = vector.load %arg5[%c13_299, %c0_300] : memref<16x32xf32, #tpu.memory_space<vmem>>, vector<1x32xf32>
    tpu.vector_store %arg5[%c13_299, %c0_300], %454 {strides = array<i32>} : memref<16x32xf32, #tpu.memory_space<vmem>>, vector<1x32xf32>,
    %c48_i32_301 = arith.constant 48 : i32
    %456 = arith.addi %0, %c48_i32_301 : i32
    %c14_i32_302 = arith.constant 14 : i32
    %457 = arith.addi %456, %c14_i32_302 : i32
    %458 = arith.index_cast %457 : i32 to index
    %459 = memref.load %arg1[%458] : memref<64xi32, #tpu.memory_space<smem>>
    %460 = arith.index_cast %459 : i32 to index
    %c0_303 = arith.constant 0 : index
    %461 = vector.load %arg2[%460, %c0_303] : memref<32x32xf32, #tpu.memory_space<vmem>>, vector<1x32xf32>
    %c14_304 = arith.constant 14 : index
    %c0_305 = arith.constant 0 : index
    %462 = vector.load %arg5[%c14_304, %c0_305] : memref<16x32xf32, #tpu.memory_space<vmem>>, vector<1x32xf32>
    tpu.vector_store %arg5[%c14_304, %c0_305], %461 {strides = array<i32>} : memref<16x32xf32, #tpu.memory_space<vmem>>, vector<1x32xf32>,
    %c48_i32_306 = arith.constant 48 : i32
    %463 = arith.addi %0, %c48_i32_306 : i32
    %c15_i32_307 = arith.constant 15 : i32
    %464 = arith.addi %463, %c15_i32_307 : i32
    %465 = arith.index_cast %464 : i32 to index
    %466 = memref.load %arg1[%465] : memref<64xi32, #tpu.memory_space<smem>>
    %467 = arith.index_cast %466 : i32 to index
    %c0_308 = arith.constant 0 : index
    %468 = vector.load %arg2[%467, %c0_308] : memref<32x32xf32, #tpu.memory_space<vmem>>, vector<1x32xf32>
    %c15_309 = arith.constant 15 : index
    %c0_310 = arith.constant 0 : index
    %469 = vector.load %arg5[%c15_309, %c0_310] : memref<16x32xf32, #tpu.memory_space<vmem>>, vector<1x32xf32>
    tpu.vector_store %arg5[%c15_309, %c0_310], %468 {strides = array<i32>} : memref<16x32xf32, #tpu.memory_space<vmem>>, vector<1x32xf32>,
    %c0_311 = arith.constant 0 : index
    %c0_312 = arith.constant 0 : index
    %470 = vector.load %arg5[%c0_311, %c0_312] : memref<16x32xf32, #tpu.memory_space<vmem>>, vector<16x32xf32>
    %c3_313 = arith.constant 3 : index
    %c0_314 = arith.constant 0 : index
    %c0_315 = arith.constant 0 : index
    %471 = vector.load %arg3[%c3_313, %c0_314, %c0_315] : memref<4x32x16xf32, #tpu.memory_space<vmem>>, vector<1x32x16xf32>
    %472 = vector.shape_cast %471 : vector<1x32x16xf32> to vector<32x16xf32>
    %cst_316 = arith.constant dense<0.000000e+00> : vector<16x16xf32>
    %473 = tpu.matmul %470, %472, %cst_316 {dimension_numbers = #tpu.dot_dimension_numbers<[1], [0], [0], [1], [0, 0, 1, 1], [], []>} : vector<16x32xf32>, vector<32x16xf32>, vector<16x16xf32> -> vector<16x16xf32>
    %c3_317 = arith.constant 3 : index
    %c0_318 = arith.constant 0 : index
    %c0_319 = arith.constant 0 : index
    %474 = vector.load %arg4[%c3_317, %c0_318, %c0_319] : memref<4x16x16xf32, #tpu.memory_space<vmem>>, vector<1x16x16xf32>
    %475 = vector.shape_cast %474 : vector<1x16x16xf32> to vector<16x16xf32>
    %476 = vector.shape_cast %473 : vector<16x16xf32> to vector<1x16x16xf32>
    tpu.vector_store %arg4[%c3_317, %c0_318, %c0_319], %476 {strides = array<i32>} : memref<4x16x16xf32, #tpu.memory_space<vmem>>, vector<1x16x16xf32>,
    return
  }
  func.func @transform_0(%arg0: i32, %arg1: memref<64xi32, #tpu.memory_space<smem>>) -> (i32, i32) {
    %c0_i32 = arith.constant 0 : i32
    %c0_i32_0 = arith.constant 0 : i32
    %c0_i32_1 = arith.constant 0 : i32
    return %c0_i32, %c0_i32_0 : i32, i32
  }
  func.func @transform_1(%arg0: i32, %arg1: memref<64xi32, #tpu.memory_space<smem>>) -> (i32, i32, i32) {
    %c0_i32 = arith.constant 0 : i32
    %c0_i32_0 = arith.constant 0 : i32
    %c0_i32_1 = arith.constant 0 : i32
    return %arg0, %c0_i32, %c0_i32_0 : i32, i32, i32
  }
  func.func @transform_2(%arg0: i32, %arg1: memref<64xi32, #tpu.memory_space<smem>>) -> (i32, i32, i32) {
    %c0_i32 = arith.constant 0 : i32
    %c0_i32_0 = arith.constant 0 : i32
    %c0_i32_1 = arith.constant 0 : i32
    return %arg0, %c0_i32, %c0_i32_0 : i32, i32, i32
  }
}

</mosaic_0001>

<llo_original>
// kernel: tpu_custom_call.1
$region0: #{tpu_custom_call.1}
  #allocation0 [shape = 'u32[]', space=smem, size = 0x4, offset = 0x4, fixed_abs, tag = 'smem constant byte address 0x4 - core index']
  #allocation1 [shape = 'u32[72,128]{1,0:T(1,128)}', space=vmem, size = 0x9000, scoped, tag = 'internal scratch']
  #allocation2 [shape = 'f32[16,32]{1,0:T(8,128)}', space=vmem, size = 0x2000, scoped, tag = 'scratch operand']
  #allocation3 [shape = 's32[1]{0}', space=sflag, size = 0x4, scoped, tag = 'scoped memory for tpu_custom_call.1']
  #allocation4 [shape = 'u8[512]{0}', space=smem, size = 0x200, scoped, tag = 'prefetched SMEM operand 0']
  %s0 = inlined_call_operand.vmem [shape: s32[64], index: 0, kind: input, shape index: {}]
  %s1 = inlined_call_operand.vmem [shape: f32[32,32], index: 1, kind: input, shape index: {}]
  %s2 = inlined_call_operand.vmem [shape: f32[4,32,16], index: 2, kind: input, shape index: {}]
  %s3 = inlined_call_operand.hbm [shape: f32[4,16,16], index: 3, kind: output, shape index: {}]
  %s4 = sld [smem:[#allocation0]]
  $region18: #{tpu_custom_call.1} parent=0
    _
  %s6 = ssub.s32 1, %s4
  %s7 = scalar_select 0, %s6, %s4
  %s9 = sshll.u32 %s0, 4
  %s10 = int_to_ptr.vmem [resolvable:$true] %s9
  %12 = dma.vmem_to_smem %s10, 16, [#allocation4], [#allocation3]
  %14 = dma.done [#allocation3], 16
  %15 = sfence
  $region1: #{tpu_custom_call.1} parent=0
    #allocation5 [shape = 'u8[32768]{0}', space=vmem, size = 0x8000, scoped, tag = 'output window, operand 0, single buffered']
    #allocation6 [shape = 's32[1]{0}', space=sflag, size = 0x4, scoped, tag = 'scoped memory for tpu_custom_call.1']
    %16 = vsyncpa [#allocation6], 0
    // Predicated region
    $region2: #{tpu_custom_call.1} parent=1 // pred_check
      _
    $region3: #{tpu_custom_call.1} parent=1 // pred_check_branch
      %18 = sbr.rel (0) target = $region5
    $region4: #{tpu_custom_call.1} parent=1 // pred_region
      _
    $region5: #{tpu_custom_call.1} parent=1 // pred_fallthru
      _
    // Predicated region
    $region6: #{tpu_custom_call.1} parent=1 // pred_check
      _
    $region7: #{tpu_custom_call.1} parent=1 // pred_check_branch
      %20 = sbr.rel (0) target = $region9
    $region8: #{tpu_custom_call.1} parent=1 // pred_region
      _
    $region9: #{tpu_custom_call.1} parent=1 // pred_fallthru
      _
    %s21 = smul.u32 0, 64
    %s22 = sld [smem:[#allocation4 + %s21]]
    %s23 = scalar_lea.vmem %s1, %s22
    %v24 = vld [vmem:[%s23] sm:$0x1]
    %vm25 = vcmask 253952
    %26 = vst.msk [vmem:[#allocation2] sm:$0x1] %vm25, %v24
    %s27 = sadd.s32 %s21, 1
    %s28 = sld [smem:[#allocation4 + %s27]]
    %s29 = scalar_lea.vmem %s1, %s28
    %v30 = vld [vmem:[%s29] sm:$0x1]
    %31 = vst.msk [vmem:[#allocation2 + $0x1] sm:$0x1] %vm25, %v30
    %s32 = sadd.s32 %s21, 2
    %s33 = sld [smem:[#allocation4 + %s32]]
    %s34 = scalar_lea.vmem %s1, %s33
    %v35 = vld [vmem:[%s34] sm:$0x1]
    %36 = vst.msk [vmem:[#allocation2 + $0x2] sm:$0x1] %vm25, %v35
    %s37 = sadd.s32 %s21, 3
    %s38 = sld [smem:[#allocation4 + %s37]]
    %s39 = scalar_lea.vmem %s1, %s38
    %v40 = vld [vmem:[%s39] sm:$0x1]
    %41 = vst.msk [vmem:[#allocation2 + $0x3] sm:$0x1] %vm25, %v40
    %s42 = sadd.s32 %s21, 4
    %s43 = sld [smem:[#allocation4 + %s42]]
    %s44 = scalar_lea.vmem %s1, %s43
    %v45 = vld [vmem:[%s44] sm:$0x1]
    %46 = vst.msk [vmem:[#allocation2 + $0x4] sm:$0x1] %vm25, %v45
    %s47 = sadd.s32 %s21, 5
    %s48 = sld [smem:[#allocation4 + %s47]]
    %s49 = scalar_lea.vmem %s1, %s48
    %v50 = vld [vmem:[%s49] sm:$0x1]
    %51 = vst.msk [vmem:[#allocation2 + $0x5] sm:$0x1] %vm25, %v50
    %s52 = sadd.s32 %s21, 6
    %s53 = sld [smem:[#allocation4 + %s52]]
    %s54 = scalar_lea.vmem %s1, %s53
    %v55 = vld [vmem:[%s54] sm:$0x1]
    %56 = vst.msk [vmem:[#allocation2 + $0x6] sm:$0x1] %vm25, %v55
    %s57 = sadd.s32 %s21, 7
    %s58 = sld [smem:[#allocation4 + %s57]]
    %s59 = scalar_lea.vmem %s1, %s58
    %v60 = vld [vmem:[%s59] sm:$0x1]
    %61 = vst.msk [vmem:[#allocation2 + $0x7] sm:$0x1] %vm25, %v60
    %s62 = sadd.s32 %s21, 8
    %s63 = sld [smem:[#allocation4 + %s62]]
    %s64 = scalar_lea.vmem %s1, %s63
    %v65 = vld [vmem:[%s64] sm:$0x1]
    %66 = vst.msk [vmem:[#allocation2 + $0x8] sm:$0x1] %vm25, %v65
    %s67 = sadd.s32 %s21, 9
    %s68 = sld [smem:[#allocation4 + %s67]]
    %s69 = scalar_lea.vmem %s1, %s68
    %v70 = vld [vmem:[%s69] sm:$0x1]
    %71 = vst.msk [vmem:[#allocation2 + $0x9] sm:$0x1] %vm25, %v70
    %s72 = sadd.s32 %s21, 10
    %s73 = sld [smem:[#allocation4 + %s72]]
    %s74 = scalar_lea.vmem %s1, %s73
    %v75 = vld [vmem:[%s74] sm:$0x1]
    %76 = vst.msk [vmem:[#allocation2 + $0xa] sm:$0x1] %vm25, %v75
    %s77 = sadd.s32 %s21, 11
    %s78 = sld [smem:[#allocation4 + %s77]]
    %s79 = scalar_lea.vmem %s1, %s78
    %v80 = vld [vmem:[%s79] sm:$0x1]
    %81 = vst.msk [vmem:[#allocation2 + $0xb] sm:$0x1] %vm25, %v80
    %s82 = sadd.s32 %s21, 12
    %s83 = sld [smem:[#allocation4 + %s82]]
    %s84 = scalar_lea.vmem %s1, %s83
    %v85 = vld [vmem:[%s84] sm:$0x1]
    %86 = vst.msk [vmem:[#allocation2 + $0xc] sm:$0x1] %vm25, %v85
    %s87 = sadd.s32 %s21, 13
    %s88 = sld [smem:[#allocation4 + %s87]]
    %s89 = scalar_lea.vmem %s1, %s88
    %v90 = vld [vmem:[%s89] sm:$0x1]
    %91 = vst.msk [vmem:[#allocation2 + $0xd] sm:$0x1] %vm25, %v90
    %s92 = sadd.s32 %s21, 14
    %s93 = sld [smem:[#allocation4 + %s92]]
    %s94 = scalar_lea.vmem %s1, %s93
    %v95 = vld [vmem:[%s94] sm:$0x1]
    %96 = vst.msk [vmem:[#allocation2 + $0xe] sm:$0x1] %vm25, %v95
    %s97 = sadd.s32 %s21, 15
    %s98 = sld [smem:[#allocation4 + %s97]]
    %s99 = scalar_lea.vmem %s1, %s98
    %v100 = vld [vmem:[%s99] sm:$0x1]
    %101 = vst.msk [vmem:[#allocation2 + $0xf] sm:$0x1] %vm25, %v100
    %v102 = vld [vmem:[#allocation2] sm:$0xff]
    %v103 = vld [vmem:[#allocation2 + $0x8] sm:$0xff]
    %v104 = vld [vmem:[%s2] sm:$0xff]
    %v105 = vld [vmem:[%s2 + $0x8] sm:$0xff]
    %v106 = vld [vmem:[%s2 + $0x10] sm:$0xff]
    %v107 = vld [vmem:[%s2 + $0x18] sm:$0xff]
    %vm108 = vcmask 261120
    %v110 = vsel %vm108, %v102, 0
    %v113 = vsel %vm108, %v103, 0
    %115 = vmatpush.msra.mxu0 0.0
    %116 = vmatpush.msra.mxu0 0.0
    %117 = vmatpush.msra.mxu0 0.0
    %118 = vmatpush.msra.mxu0 0.0
    %119 = vmatpush.msra.mxu0 0.0
    %120 = vmatpush.msra.mxu0 0.0
    %121 = vmatpush.msra.mxu0 0.0
    %122 = vmatpush.msra.mxu0 0.0
    %123 = vmatpush.msra.mxu0 0.0
    %124 = vmatpush.msra.mxu0 0.0
    %125 = vmatpush.msra.mxu0 0.0
    %126 = vmatpush.msra.mxu0 0.0
    %127 = vmatpush.msra.mxu0 %v107
    %128 = vmatpush.msra.mxu0 %v106
    %129 = vmatpush.msra.mxu0 %v105
    %130 = vmatpush.msra.mxu0 %v104
    %131 = vmatmul.f32.gmra.mxu0 %v110
    %v132 = vpop.f32.mrf.mxu0
    %v133 = vadd.f32 0.0, %v132
    %134 = vmatmul.f32.gmra.mxu0 %v113
    %v135 = vpop.f32.mrf.mxu0
    %v136 = vadd.f32 0.0, %v135
    %137 = vdwg.mxu0
    %vm138 = vcmask 130048
    %139 = vst.msk [vmem:[#allocation5] sm:$0xff] %vm138, %v133
    %140 = vst.msk [vmem:[#allocation5 + $0x8] sm:$0xff] %vm138, %v136
    %s141 = sadd.s32 %s21, 16
    %s142 = sld [smem:[#allocation4 + %s141]]
    %s143 = scalar_lea.vmem %s1, %s142
    %v144 = vld [vmem:[%s143] sm:$0x1]
    %145 = vst.msk [vmem:[#allocation2] sm:$0x1] %vm25, %v144
    %s146 = sadd.s32 %s21, 17
    %s147 = sld [smem:[#allocation4 + %s146]]
    %s148 = scalar_lea.vmem %s1, %s147
    %v149 = vld [vmem:[%s148] sm:$0x1]
    %150 = vst.msk [vmem:[#allocation2 + $0x1] sm:$0x1] %vm25, %v149
    %s151 = sadd.s32 %s21, 18
    %s152 = sld [smem:[#allocation4 + %s151]]
    %s153 = scalar_lea.vmem %s1, %s152
    %v154 = vld [vmem:[%s153] sm:$0x1]
    %155 = vst.msk [vmem:[#allocation2 + $0x2] sm:$0x1] %vm25, %v154
    %s156 = sadd.s32 %s21, 19
    %s157 = sld [smem:[#allocation4 + %s156]]
    %s158 = scalar_lea.vmem %s1, %s157
    %v159 = vld [vmem:[%s158] sm:$0x1]
    %160 = vst.msk [vmem:[#allocation2 + $0x3] sm:$0x1] %vm25, %v159
    %s161 = sadd.s32 %s21, 20
    %s162 = sld [smem:[#allocation4 + %s161]]
    %s163 = scalar_lea.vmem %s1, %s162
    %v164 = vld [vmem:[%s163] sm:$0x1]
    %165 = vst.msk [vmem:[#allocation2 + $0x4] sm:$0x1] %vm25, %v164
    %s166 = sadd.s32 %s21, 21
    %s167 = sld [smem:[#allocation4 + %s166]]
    %s168 = scalar_lea.vmem %s1, %s167
    %v169 = vld [vmem:[%s168] sm:$0x1]
    %170 = vst.msk [vmem:[#allocation2 + $0x5] sm:$0x1] %vm25, %v169
    %s171 = sadd.s32 %s21, 22
    %s172 = sld [smem:[#allocation4 + %s171]]
    %s173 = scalar_lea.vmem %s1, %s172
    %v174 = vld [vmem:[%s173] sm:$0x1]
    %175 = vst.msk [vmem:[#allocation2 + $0x6] sm:$0x1] %vm25, %v174
    %s176 = sadd.s32 %s21, 23
    %s177 = sld [smem:[#allocation4 + %s176]]
    %s178 = scalar_lea.vmem %s1, %s177
    %v179 = vld [vmem:[%s178] sm:$0x1]
    %180 = vst.msk [vmem:[#allocation2 + $0x7] sm:$0x1] %vm25, %v179
    %s181 = sadd.s32 %s21, 24
    %s182 = sld [smem:[#allocation4 + %s181]]
    %s183 = scalar_lea.vmem %s1, %s182
    %v184 = vld [vmem:[%s183] sm:$0x1]
    %185 = vst.msk [vmem:[#allocation2 + $0x8] sm:$0x1] %vm25, %v184
    %s186 = sadd.s32 %s21, 25
    %s187 = sld [smem:[#allocation4 + %s186]]
    %s188 = scalar_lea.vmem %s1, %s187
    %v189 = vld [vmem:[%s188] sm:$0x1]
    %190 = vst.msk [vmem:[#allocation2 + $0x9] sm:$0x1] %vm25, %v189
    %s191 = sadd.s32 %s21, 26
    %s192 = sld [smem:[#allocation4 + %s191]]
    %s193 = scalar_lea.vmem %s1, %s192
    %v194 = vld [vmem:[%s193] sm:$0x1]
    %195 = vst.msk [vmem:[#allocation2 + $0xa] sm:$0x1] %vm25, %v194
    %s196 = sadd.s32 %s21, 27
    %s197 = sld [smem:[#allocation4 + %s196]]
    %s198 = scalar_lea.vmem %s1, %s197
    %v199 = vld [vmem:[%s198] sm:$0x1]
    %200 = vst.msk [vmem:[#allocation2 + $0xb] sm:$0x1] %vm25, %v199
    %s201 = sadd.s32 %s21, 28
    %s202 = sld [smem:[#allocation4 + %s201]]
    %s203 = scalar_lea.vmem %s1, %s202
    %v204 = vld [vmem:[%s203] sm:$0x1]
    %205 = vst.msk [vmem:[#allocation2 + $0xc] sm:$0x1] %vm25, %v204
    %s206 = sadd.s32 %s21, 29
    %s207 = sld [smem:[#allocation4 + %s206]]
    %s208 = scalar_lea.vmem %s1, %s207
    %v209 = vld [vmem:[%s208] sm:$0x1]
    %210 = vst.msk [vmem:[#allocation2 + $0xd] sm:$0x1] %vm25, %v209
    %s211 = sadd.s32 %s21, 30
    %s212 = sld [smem:[#allocation4 + %s211]]
    %s213 = scalar_lea.vmem %s1, %s212
    %v214 = vld [vmem:[%s213] sm:$0x1]
    %215 = vst.msk [vmem:[#allocation2 + $0xe] sm:$0x1] %vm25, %v214
    %s216 = sadd.s32 %s21, 31
    %s217 = sld [smem:[#allocation4 + %s216]]
    %s218 = scalar_lea.vmem %s1, %s217
    %v219 = vld [vmem:[%s218] sm:$0x1]
    %220 = vst.msk [vmem:[#allocation2 + $0xf] sm:$0x1] %vm25, %v219
    %v221 = vld [vmem:[#allocation2] sm:$0xff]
    %v222 = vld [vmem:[#allocation2 + $0x8] sm:$0xff]
    %s223 = scalar_lea.vmem %s2, 32
    %v224 = vld [vmem:[%s223] sm:$0xff]
    %v225 = vld [vmem:[%s223 + $0x8] sm:$0xff]
    %v226 = vld [vmem:[%s223 + $0x10] sm:$0xff]
    %v227 = vld [vmem:[%s223 + $0x18] sm:$0xff]
    %v229 = vsel %vm108, %v221, 0
    %v232 = vsel %vm108, %v222, 0
    %234 = vmatpush.msra.mxu0 0.0
    %235 = vmatpush.msra.mxu0 0.0
    %236 = vmatpush.msra.mxu0 0.0
    %237 = vmatpush.msra.mxu0 0.0
    %238 = vmatpush.msra.mxu0 0.0
    %239 = vmatpush.msra.mxu0 0.0
    %240 = vmatpush.msra.mxu0 0.0
    %241 = vmatpush.msra.mxu0 0.0
    %242 = vmatpush.msra.mxu0 0.0
    %243 = vmatpush.msra.mxu0 0.0
    %244 = vmatpush.msra.mxu0 0.0
    %245 = vmatpush.msra.mxu0 0.0
    %246 = vmatpush.msra.mxu0 %v227
    %247 = vmatpush.msra.mxu0 %v226
    %248 = vmatpush.msra.mxu0 %v225
    %249 = vmatpush.msra.mxu0 %v224
    %250 = vmatmul.f32.gmra.mxu0 %v229
    %v251 = vpop.f32.mrf.mxu0
    %v252 = vadd.f32 0.0, %v251
    %253 = vmatmul.f32.gmra.mxu0 %v232
    %v254 = vpop.f32.mrf.mxu0
    %v255 = vadd.f32 0.0, %v254
    %256 = vdwg.mxu0
    %s257 = scalar_lea.vmem [#allocation5], 16
    %258 = vst.msk [vmem:[%s257] sm:$0xff] %vm138, %v252
    %259 = vst.msk [vmem:[%s257 + $0x8] sm:$0xff] %vm138, %v255
    %s260 = sadd.s32 %s21, 32
    %s261 = sld [smem:[#allocation4 + %s260]]
    %s262 = scalar_lea.vmem %s1, %s261
    %v263 = vld [vmem:[%s262] sm:$0x1]
    %264 = vst.msk [vmem:[#allocation2] sm:$0x1] %vm25, %v263
    %s265 = sadd.s32 %s21, 33
    %s266 = sld [smem:[#allocation4 + %s265]]
    %s267 = scalar_lea.vmem %s1, %s266
    %v268 = vld [vmem:[%s267] sm:$0x1]
    %269 = vst.msk [vmem:[#allocation2 + $0x1] sm:$0x1] %vm25, %v268
    %s270 = sadd.s32 %s21, 34
    %s271 = sld [smem:[#allocation4 + %s270]]
    %s272 = scalar_lea.vmem %s1, %s271
    %v273 = vld [vmem:[%s272] sm:$0x1]
    %274 = vst.msk [vmem:[#allocation2 + $0x2] sm:$0x1] %vm25, %v273
    %s275 = sadd.s32 %s21, 35
    %s276 = sld [smem:[#allocation4 + %s275]]
    %s277 = scalar_lea.vmem %s1, %s276
    %v278 = vld [vmem:[%s277] sm:$0x1]
    %279 = vst.msk [vmem:[#allocation2 + $0x3] sm:$0x1] %vm25, %v278
    %s280 = sadd.s32 %s21, 36
    %s281 = sld [smem:[#allocation4 + %s280]]
    %s282 = scalar_lea.vmem %s1, %s281
    %v283 = vld [vmem:[%s282] sm:$0x1]
    %284 = vst.msk [vmem:[#allocation2 + $0x4] sm:$0x1] %vm25, %v283
    %s285 = sadd.s32 %s21, 37
    %s286 = sld [smem:[#allocation4 + %s285]]
    %s287 = scalar_lea.vmem %s1, %s286
    %v288 = vld [vmem:[%s287] sm:$0x1]
    %289 = vst.msk [vmem:[#allocation2 + $0x5] sm:$0x1] %vm25, %v288
    %s290 = sadd.s32 %s21, 38
    %s291 = sld [smem:[#allocation4 + %s290]]
    %s292 = scalar_lea.vmem %s1, %s291
    %v293 = vld [vmem:[%s292] sm:$0x1]
    %294 = vst.msk [vmem:[#allocation2 + $0x6] sm:$0x1] %vm25, %v293
    %s295 = sadd.s32 %s21, 39
    %s296 = sld [smem:[#allocation4 + %s295]]
    %s297 = scalar_lea.vmem %s1, %s296
    %v298 = vld [vmem:[%s297] sm:$0x1]
    %299 = vst.msk [vmem:[#allocation2 + $0x7] sm:$0x1] %vm25, %v298
    %s300 = sadd.s32 %s21, 40
    %s301 = sld [smem:[#allocation4 + %s300]]
    %s302 = scalar_lea.vmem %s1, %s301
    %v303 = vld [vmem:[%s302] sm:$0x1]
    %304 = vst.msk [vmem:[#allocation2 + $0x8] sm:$0x1] %vm25, %v303
    %s305 = sadd.s32 %s21, 41
    %s306 = sld [smem:[#allocation4 + %s305]]
    %s307 = scalar_lea.vmem %s1, %s306
    %v308 = vld [vmem:[%s307] sm:$0x1]
    %309 = vst.msk [vmem:[#allocation2 + $0x9] sm:$0x1] %vm25, %v308
    %s310 = sadd.s32 %s21, 42
    %s311 = sld [smem:[#allocation4 + %s310]]
    %s312 = scalar_lea.vmem %s1, %s311
    %v313 = vld [vmem:[%s312] sm:$0x1]
    %314 = vst.msk [vmem:[#allocation2 + $0xa] sm:$0x1] %vm25, %v313
    %s315 = sadd.s32 %s21, 43
    %s316 = sld [smem:[#allocation4 + %s315]]
    %s317 = scalar_lea.vmem %s1, %s316
    %v318 = vld [vmem:[%s317] sm:$0x1]
    %319 = vst.msk [vmem:[#allocation2 + $0xb] sm:$0x1] %vm25, %v318
    %s320 = sadd.s32 %s21, 44
    %s321 = sld [smem:[#allocation4 + %s320]]
    %s322 = scalar_lea.vmem %s1, %s321
    %v323 = vld [vmem:[%s322] sm:$0x1]
    %324 = vst.msk [vmem:[#allocation2 + $0xc] sm:$0x1] %vm25, %v323
    %s325 = sadd.s32 %s21, 45
    %s326 = sld [smem:[#allocation4 + %s325]]
    %s327 = scalar_lea.vmem %s1, %s326
    %v328 = vld [vmem:[%s327] sm:$0x1]
    %329 = vst.msk [vmem:[#allocation2 + $0xd] sm:$0x1] %vm25, %v328
    %s330 = sadd.s32 %s21, 46
    %s331 = sld [smem:[#allocation4 + %s330]]
    %s332 = scalar_lea.vmem %s1, %s331
    %v333 = vld [vmem:[%s332] sm:$0x1]
    %334 = vst.msk [vmem:[#allocation2 + $0xe] sm:$0x1] %vm25, %v333
    %s335 = sadd.s32 %s21, 47
    %s336 = sld [smem:[#allocation4 + %s335]]
    %s337 = scalar_lea.vmem %s1, %s336
    %v338 = vld [vmem:[%s337] sm:$0x1]
    %339 = vst.msk [vmem:[#allocation2 + $0xf] sm:$0x1] %vm25, %v338
    %v340 = vld [vmem:[#allocation2] sm:$0xff]
    %v341 = vld [vmem:[#allocation2 + $0x8] sm:$0xff]
    %s342 = scalar_lea.vmem %s2, 64
    %v343 = vld [vmem:[%s342] sm:$0xff]
    %v344 = vld [vmem:[%s342 + $0x8] sm:$0xff]
    %v345 = vld [vmem:[%s342 + $0x10] sm:$0xff]
    %v346 = vld [vmem:[%s342 + $0x18] sm:$0xff]
    %v348 = vsel %vm108, %v340, 0
    %v351 = vsel %vm108, %v341, 0
    %353 = vmatpush.msra.mxu0 0.0
    %354 = vmatpush.msra.mxu0 0.0
    %355 = vmatpush.msra.mxu0 0.0
    %356 = vmatpush.msra.mxu0 0.0
    %357 = vmatpush.msra.mxu0 0.0
    %358 = vmatpush.msra.mxu0 0.0
    %359 = vmatpush.msra.mxu0 0.0
    %360 = vmatpush.msra.mxu0 0.0
    %361 = vmatpush.msra.mxu0 0.0
    %362 = vmatpush.msra.mxu0 0.0
    %363 = vmatpush.msra.mxu0 0.0
    %364 = vmatpush.msra.mxu0 0.0
    %365 = vmatpush.msra.mxu0 %v346
    %366 = vmatpush.msra.mxu0 %v345
    %367 = vmatpush.msra.mxu0 %v344
    %368 = vmatpush.msra.mxu0 %v343
    %369 = vmatmul.f32.gmra.mxu0 %v348
    %v370 = vpop.f32.mrf.mxu0
    %v371 = vadd.f32 0.0, %v370
    %372 = vmatmul.f32.gmra.mxu0 %v351
    %v373 = vpop.f32.mrf.mxu0
    %v374 = vadd.f32 0.0, %v373
    %375 = vdwg.mxu0
    %s376 = scalar_lea.vmem [#allocation5], 32
    %377 = vst.msk [vmem:[%s376] sm:$0xff] %vm138, %v371
    %378 = vst.msk [vmem:[%s376 + $0x8] sm:$0xff] %vm138, %v374
    %s379 = sadd.s32 %s21, 48
    %s380 = sld [smem:[#allocation4 + %s379]]
    %s381 = scalar_lea.vmem %s1, %s380
    %v382 = vld [vmem:[%s381] sm:$0x1]
    %383 = vst.msk [vmem:[#allocation2] sm:$0x1] %vm25, %v382
    %s384 = sadd.s32 %s21, 49
    %s385 = sld [smem:[#allocation4 + %s384]]
    %s386 = scalar_lea.vmem %s1, %s385
    %v387 = vld [vmem:[%s386] sm:$0x1]
    %388 = vst.msk [vmem:[#allocation2 + $0x1] sm:$0x1] %vm25, %v387
    %s389 = sadd.s32 %s21, 50
    %s390 = sld [smem:[#allocation4 + %s389]]
    %s391 = scalar_lea.vmem %s1, %s390
    %v392 = vld [vmem:[%s391] sm:$0x1]
    %393 = vst.msk [vmem:[#allocation2 + $0x2] sm:$0x1] %vm25, %v392
    %s394 = sadd.s32 %s21, 51
    %s395 = sld [smem:[#allocation4 + %s394]]
    %s396 = scalar_lea.vmem %s1, %s395
    %v397 = vld [vmem:[%s396] sm:$0x1]
    %398 = vst.msk [vmem:[#allocation2 + $0x3] sm:$0x1] %vm25, %v397
    %s399 = sadd.s32 %s21, 52
    %s400 = sld [smem:[#allocation4 + %s399]]
    %s401 = scalar_lea.vmem %s1, %s400
    %v402 = vld [vmem:[%s401] sm:$0x1]
    %403 = vst.msk [vmem:[#allocation2 + $0x4] sm:$0x1] %vm25, %v402
    %s404 = sadd.s32 %s21, 53
    %s405 = sld [smem:[#allocation4 + %s404]]
    %s406 = scalar_lea.vmem %s1, %s405
    %v407 = vld [vmem:[%s406] sm:$0x1]
    %408 = vst.msk [vmem:[#allocation2 + $0x5] sm:$0x1] %vm25, %v407
    %s409 = sadd.s32 %s21, 54
    %s410 = sld [smem:[#allocation4 + %s409]]
    %s411 = scalar_lea.vmem %s1, %s410
    %v412 = vld [vmem:[%s411] sm:$0x1]
    %413 = vst.msk [vmem:[#allocation2 + $0x6] sm:$0x1] %vm25, %v412
    %s414 = sadd.s32 %s21, 55
    %s415 = sld [smem:[#allocation4 + %s414]]
    %s416 = scalar_lea.vmem %s1, %s415
    %v417 = vld [vmem:[%s416] sm:$0x1]
    %418 = vst.msk [vmem:[#allocation2 + $0x7] sm:$0x1] %vm25, %v417
    %s419 = sadd.s32 %s21, 56
    %s420 = sld [smem:[#allocation4 + %s419]]
    %s421 = scalar_lea.vmem %s1, %s420
    %v422 = vld [vmem:[%s421] sm:$0x1]
    %423 = vst.msk [vmem:[#allocation2 + $0x8] sm:$0x1] %vm25, %v422
    %s424 = sadd.s32 %s21, 57
    %s425 = sld [smem:[#allocation4 + %s424]]
    %s426 = scalar_lea.vmem %s1, %s425
    %v427 = vld [vmem:[%s426] sm:$0x1]
    %428 = vst.msk [vmem:[#allocation2 + $0x9] sm:$0x1] %vm25, %v427
    %s429 = sadd.s32 %s21, 58
    %s430 = sld [smem:[#allocation4 + %s429]]
    %s431 = scalar_lea.vmem %s1, %s430
    %v432 = vld [vmem:[%s431] sm:$0x1]
    %433 = vst.msk [vmem:[#allocation2 + $0xa] sm:$0x1] %vm25, %v432
    %s434 = sadd.s32 %s21, 59
    %s435 = sld [smem:[#allocation4 + %s434]]
    %s436 = scalar_lea.vmem %s1, %s435
    %v437 = vld [vmem:[%s436] sm:$0x1]
    %438 = vst.msk [vmem:[#allocation2 + $0xb] sm:$0x1] %vm25, %v437
    %s439 = sadd.s32 %s21, 60
    %s440 = sld [smem:[#allocation4 + %s439]]
    %s441 = scalar_lea.vmem %s1, %s440
    %v442 = vld [vmem:[%s441] sm:$0x1]
    %443 = vst.msk [vmem:[#allocation2 + $0xc] sm:$0x1] %vm25, %v442
    %s444 = sadd.s32 %s21, 61
    %s445 = sld [smem:[#allocation4 + %s444]]
    %s446 = scalar_lea.vmem %s1, %s445
    %v447 = vld [vmem:[%s446] sm:$0x1]
    %448 = vst.msk [vmem:[#allocation2 + $0xd] sm:$0x1] %vm25, %v447
    %s449 = sadd.s32 %s21, 62
    %s450 = sld [smem:[#allocation4 + %s449]]
    %s451 = scalar_lea.vmem %s1, %s450
    %v452 = vld [vmem:[%s451] sm:$0x1]
    %453 = vst.msk [vmem:[#allocation2 + $0xe] sm:$0x1] %vm25, %v452
    %s454 = sadd.s32 %s21, 63
    %s455 = sld [smem:[#allocation4 + %s454]]
    %s456 = scalar_lea.vmem %s1, %s455
    %v457 = vld [vmem:[%s456] sm:$0x1]
    %458 = vst.msk [vmem:[#allocation2 + $0xf] sm:$0x1] %vm25, %v457
    %v459 = vld [vmem:[#allocation2] sm:$0xff]
    %v460 = vld [vmem:[#allocation2 + $0x8] sm:$0xff]
    %s461 = scalar_lea.vmem %s2, 96
    %v462 = vld [vmem:[%s461] sm:$0xff]
    %v463 = vld [vmem:[%s461 + $0x8] sm:$0xff]
    %v464 = vld [vmem:[%s461 + $0x10] sm:$0xff]
    %v465 = vld [vmem:[%s461 + $0x18] sm:$0xff]
    %v467 = vsel %vm108, %v459, 0
    %v470 = vsel %vm108, %v460, 0
    %472 = vmatpush.msra.mxu0 0.0
    %473 = vmatpush.msra.mxu0 0.0
    %474 = vmatpush.msra.mxu0 0.0
    %475 = vmatpush.msra.mxu0 0.0
    %476 = vmatpush.msra.mxu0 0.0
    %477 = vmatpush.msra.mxu0 0.0
    %478 = vmatpush.msra.mxu0 0.0
    %479 = vmatpush.msra.mxu0 0.0
    %480 = vmatpush.msra.mxu0 0.0
    %481 = vmatpush.msra.mxu0 0.0
    %482 = vmatpush.msra.mxu0 0.0
    %483 = vmatpush.msra.mxu0 0.0
    %484 = vmatpush.msra.mxu0 %v465
    %485 = vmatpush.msra.mxu0 %v464
    %486 = vmatpush.msra.mxu0 %v463
    %487 = vmatpush.msra.mxu0 %v462
    %488 = vmatmul.f32.gmra.mxu0 %v467
    %v489 = vpop.f32.mrf.mxu0
    %v490 = vadd.f32 0.0, %v489
    %491 = vmatmul.f32.gmra.mxu0 %v470
    %v492 = vpop.f32.mrf.mxu0
    %v493 = vadd.f32 0.0, %v492
    %494 = vdwg.mxu0
    %s495 = scalar_lea.vmem [#allocation5], 48
    %496 = vst.msk [vmem:[%s495] sm:$0xff] %vm138, %v490
    %497 = vst.msk [vmem:[%s495 + $0x8] sm:$0xff] %vm138, %v493
    // Predicated region
    $region10: #{tpu_custom_call.1} parent=1 // pred_check
      _
    $region11: #{tpu_custom_call.1} parent=1 // pred_check_branch
      %499 = sbr.rel (0) target = $region13
    $region12: #{tpu_custom_call.1} parent=1 // pred_region
      %501 = vsyncadd [#allocation6], 0
      %s502 = sshll.u32 [#allocation5], 4
      %s503 = int_to_ptr.vmem [resolvable:$true] %s502
      %s504 = sshll.u32 %s3, 4
      %s505 = int_to_ptr.hbm [resolvable:$true] %s504
      %510 = dma.vmem_to_hbm [thread:$0]  %s503, 1024, %s505, [#allocation6], 128, 128, 8
    $region13: #{tpu_custom_call.1} parent=1 // pred_fallthru
      _
    // Predicated region
    $region14: #{tpu_custom_call.1} parent=1 // pred_check
      _
    $region15: #{tpu_custom_call.1} parent=1 // pred_check_branch
      %512 = sbr.rel (0) target = $region17
    $region16: #{tpu_custom_call.1} parent=1 // pred_region
      %514 = dma.done [#allocation6], 1024
    $region17: #{tpu_custom_call.1} parent=1 // pred_fallthru
      _
    %515 = vsyncpa [#allocation6], 1

</llo_original>
